<compile_context>
chip_gen: v7x
topology: tpu7x:2x2x1
jax: 0.10.0
libtpu: 0.0.40
codegen_flags: <defaults>
</compile_context>

<pallas_src>
import functools

import jax
import jax.numpy as jnp
from jax.experimental import pallas as pl
from jax.experimental.pallas import tpu as pltpu

LANE = 128      # f32 lane width
SUBLANE = 8     # f32 sublane height


# ----------------------------------------------------------------------------
# Padding helpers (wrapper side, run once on params / per call on activations)
# ----------------------------------------------------------------------------

def _round_up(n, m):
    return ((n + m - 1) // m) * m


def _pad2d(a, rows, cols):
    r, c = a.shape
    return jnp.pad(a, ((0, rows - r), (0, cols - c)))


# ----------------------------------------------------------------------------
# The single fused Pallas kernel
# ----------------------------------------------------------------------------

def _fused_hntm_kernel(*refs, n_enc, n_dec, n_clu, t_valid, v_valid, lane):
    # ---- unpack refs (flat order must match the wrapper) ----
    idx = 0
    x = refs[idx][...]; idx += 1
    eps = refs[idx][...]; idx += 1

    def take_layers(n):
        nonlocal idx
        layers = [(refs[idx + 2 * i], refs[idx + 2 * i + 1]) for i in range(n)]
        idx += 2 * n
        return layers

    enc = take_layers(n_enc)
    w_mulv, b_mulv = refs[idx], refs[idx + 1]; idx += 2     # fused [fc_mu | fc_logvar]
    w_gsm, b_gsm = refs[idx], refs[idx + 1]; idx += 2
    dec = take_layers(n_dec)
    clu = take_layers(n_clu)
    xr_ref, out_ref, mu_ref, lv_ref = refs[idx], refs[idx + 1], refs[idx + 2], refs[idx + 3]

    # ---- helpers ----
    def linear(h, w_ref, b_ref, relu):
        y = jnp.dot(h, w_ref[...], preferred_element_type=jnp.float32) + b_ref[...]
        return jnp.maximum(y, 0.0) if relu else y

    def masked_softmax(logits, n_valid):
        # padded lanes must not contribute to the normalization denominator
        lane_ids = jax.lax.broadcasted_iota(jnp.int32, logits.shape, logits.ndim - 1)
        z = jnp.where(lane_ids < n_valid, logits, jnp.full_like(logits, -1e30))
        m = jnp.max(z, axis=-1, keepdims=True)
        e = jnp.exp(z - m)
        denom = jnp.sum(e, axis=-1, keepdims=True)
        return e * pl.reciprocal(denom, approx=True)

    # ---- NVDM-GSM encode ----
    h = x
    for w, b in enc:
        h = linear(h, w, b, relu=True)          # relu(dropout(Linear)) == relu(Linear) in eval

    # ---- fused fc_mu / fc_logvar (single MXU pass) ----
    mulv = jnp.dot(h, w_mulv[...], preferred_element_type=jnp.float32) + b_mulv[...]
    mu = mulv[:, :lane]
    logvar = mulv[:, lane:]

    # ---- reparameterize (fixed eps) + GSM topic mixture ----
    z = mu + jnp.exp(0.5 * logvar) * eps
    theta = masked_softmax(linear(z, w_gsm, b_gsm, relu=False), t_valid)

    # ---- decode (relu between layers, none on the last) ----
    h = theta
    for i, (w, b) in enumerate(dec):
        h = linear(h, w, b, relu=(i < n_dec - 1))
    x_reconst = h

    # ---- cluster_decode(softmax(x_reconst, dim=1)) ----
    h = masked_softmax(x_reconst, v_valid)
    for w, b in clu:
        h = linear(h, w, b, relu=True)
    out = h

    # ---- lane-dense (128-wide) output stores ----
    xr_ref[...] = x_reconst
    out_ref[...] = out
    mu_ref[...] = mu
    lv_ref[...] = logvar


# ----------------------------------------------------------------------------
# Deterministic parameter init (synthetic; no checkpoint loading)
# ----------------------------------------------------------------------------

def _init_linear(key, fan_in, fan_out):
    kw, kb = jax.random.split(key)
    w = jax.random.normal(kw, (fan_in, fan_out), jnp.float32) / jnp.sqrt(float(fan_in))
    b = jax.random.normal(kb, (1, fan_out), jnp.float32) * 0.01
    return w, b


def init_params(key, encode_dims, decode_dims, cluster_decode_dims):
    n_keys = (len(encode_dims) - 2) + 3 + (len(decode_dims) - 1) + (len(cluster_decode_dims) - 1)
    keys = iter(jax.random.split(key, n_keys))
    params = {}
    params["encoder"] = [_init_linear(next(keys), encode_dims[i], encode_dims[i + 1])
                         for i in range(len(encode_dims) - 2)]
    params["fc_mu"] = _init_linear(next(keys), encode_dims[-2], encode_dims[-1])
    params["fc_logvar"] = _init_linear(next(keys), encode_dims[-2], encode_dims[-1])
    params["fc_gsm"] = _init_linear(next(keys), encode_dims[-1], encode_dims[-1])
    params["decoder"] = [_init_linear(next(keys), decode_dims[i], decode_dims[i + 1])
                         for i in range(len(decode_dims) - 1)]
    params["cluster_decoder"] = [_init_linear(next(keys), cluster_decode_dims[i],
                                              cluster_decode_dims[i + 1])
                                 for i in range(len(cluster_decode_dims) - 1)]
    return params


def pad_params(params):
    """Zero-pad every weight/bias to 128-lane-aligned slabs (done once)."""
    def pad_layer(wb):
        w, b = wb
        return _pad2d(w, LANE, LANE), _pad2d(b, 1, LANE)

    pp = {
        "encoder": [pad_layer(l) for l in params["encoder"]],
        "fc_gsm": pad_layer(params["fc_gsm"]),
        "decoder": [pad_layer(l) for l in params["decoder"]],
        "cluster_decoder": [pad_layer(l) for l in params["cluster_decoder"]],
    }
    # fuse fc_mu / fc_logvar along N: one (128, 256) weight, one (1, 256) bias
    (w_mu, b_mu), (w_lv, b_lv) = params["fc_mu"], params["fc_logvar"]
    pp["fc_mulv"] = (
        jnp.concatenate([_pad2d(w_mu, LANE, LANE), _pad2d(w_lv, LANE, LANE)], axis=1),
        jnp.concatenate([_pad2d(b_mu, 1, LANE), _pad2d(b_lv, 1, LANE)], axis=1),
    )
    return pp


# ----------------------------------------------------------------------------
# MyHNTM.forward (gsm branch) — one fused pallas_call
# ----------------------------------------------------------------------------

def hntm_forward(padded_params, x, eps, *, vocab, topics, clusters):
    B = x.shape[0]
    Bp = _round_up(B, SUBLANE)

    xp = _pad2d(x, Bp, LANE)
    epsp = _pad2d(eps, Bp, LANE)

    args = [xp, epsp]
    for w, b in padded_params["encoder"]:
        args += [w, b]
    args += list(padded_params["fc_mulv"])
    args += list(padded_params["fc_gsm"])
    for w, b in padded_params["decoder"]:
        args += [w, b]
    for w, b in padded_params["cluster_decoder"]:
        args += [w, b]

    n_enc = len(padded_params["encoder"])
    n_dec = len(padded_params["decoder"])
    n_clu = len(padded_params["cluster_decoder"])

    kernel = functools.partial(
        _fused_hntm_kernel,
        n_enc=n_enc, n_dec=n_dec, n_clu=n_clu,
        t_valid=topics, v_valid=vocab, lane=LANE,
    )

    in_specs = [pl.BlockSpec(a.shape, lambda i: (0, 0)) for a in args]
    out_shapes = tuple(jax.ShapeDtypeStruct((Bp, LANE), jnp.float32) for _ in range(4))
    out_specs = tuple(pl.BlockSpec((Bp, LANE), lambda i: (0, 0)) for _ in range(4))

    xr_p, out_p, mu_p, lv_p = pl.pallas_call(
        kernel,
        grid=(1,),                      # tiny problem: one grid step, no batch tiling
        in_specs=in_specs,
        out_specs=out_specs,
        out_shape=out_shapes,
        compiler_params=pltpu.CompilerParams(dimension_semantics=("arbitrary",)),
    )(*args)

    # slice padded slabs back to the true widths
    return (xr_p[:B, :vocab], out_p[:B, :clusters], mu_p[:B, :topics], lv_p[:B, :topics])


# ----------------------------------------------------------------------------
# Pure-JAX reference (for a loose numerical check)
# ----------------------------------------------------------------------------

def reference_forward(params, x, eps):
    h = x
    for w, b in params["encoder"]:
        h = jax.nn.relu(h @ w + b)
    mu = h @ params["fc_mu"][0] + params["fc_mu"][1]
    logvar = h @ params["fc_logvar"][0] + params["fc_logvar"][1]
    z = mu + jnp.exp(0.5 * logvar) * eps
    theta = jax.nn.softmax(z @ params["fc_gsm"][0] + params["fc_gsm"][1], axis=1)
    h = theta
    dec = params["decoder"]
    for i, (w, b) in enumerate(dec):
        h = h @ w + b
        if i < len(dec) - 1:
            h = jax.nn.relu(h)
    x_reconst = h
    h = jax.nn.softmax(x_reconst, axis=1)
    for w, b in params["cluster_decoder"]:
        h = jax.nn.relu(h @ w + b)
    return x_reconst, h, mu, logvar


# ----------------------------------------------------------------------------
# Driver
# ----------------------------------------------------------------------------

if __name__ == "__main__":
    encode_dims = [32, 24, 8]          # vocab -> hidden -> num_topics
    decode_dims = [8, 24, 32]          # num_topics -> hidden -> vocab
    cluster_decode_dims = [32, 16, 4]  # vocab -> hidden -> num_clusters
    batch = 8

    vocab = encode_dims[0]
    topics = encode_dims[-1]
    clusters = cluster_decode_dims[-1]

    key = jax.random.PRNGKey(0)
    kx, keps, kp = jax.random.split(key, 3)

    x = jax.random.uniform(kx, (batch, vocab), dtype=jnp.float32)        # bag-of-words
    eps = jax.random.normal(keps, (batch, topics), dtype=jnp.float32)    # fixed reparam noise
    params = init_params(kp, encode_dims, decode_dims, cluster_decode_dims)
    padded_params = pad_params(params)

    x_reconst, out, mu, logvar = hntm_forward(
        padded_params, x, eps, vocab=vocab, topics=topics, clusters=clusters)
    jax.block_until_ready((x_reconst, out, mu, logvar))

    assert x_reconst.shape == (batch, vocab)
    assert out.shape == (batch, clusters)
    assert mu.shape == (batch, topics)
    assert logvar.shape == (batch, topics)
    assert bool(jnp.all(jnp.isfinite(x_reconst))) and bool(jnp.all(jnp.isfinite(out)))

    # loose check vs pure-JAX reference (approx reciprocal in fused softmaxes)
    xr_ref, out_ref, mu_ref, lv_ref = reference_forward(params, x, eps)
    assert bool(jnp.allclose(mu, mu_ref, atol=2e-2, rtol=2e-2))
    assert bool(jnp.allclose(logvar, lv_ref, atol=2e-2, rtol=2e-2))
    assert bool(jnp.allclose(x_reconst, xr_ref, atol=2e-2, rtol=2e-2))
    assert bool(jnp.allclose(out, out_ref, atol=2e-2, rtol=2e-2))

    print("KERNEL_OK")
</pallas_src>

<mosaic_0001>
module attributes {stable_mosaic.version = 11 : i64} {
  func.func @_fused_hntm_kernel(%arg0: i32, %arg1: memref<8x128xf32, #tpu.memory_space<vmem>>, %arg2: memref<8x128xf32, #tpu.memory_space<vmem>>, %arg3: memref<128x128xf32, #tpu.memory_space<vmem>>, %arg4: memref<1x128xf32, #tpu.memory_space<vmem>>, %arg5: memref<128x256xf32, #tpu.memory_space<vmem>>, %arg6: memref<1x256xf32, #tpu.memory_space<vmem>>, %arg7: memref<128x128xf32, #tpu.memory_space<vmem>>, %arg8: memref<1x128xf32, #tpu.memory_space<vmem>>, %arg9: memref<128x128xf32, #tpu.memory_space<vmem>>, %arg10: memref<1x128xf32, #tpu.memory_space<vmem>>, %arg11: memref<128x128xf32, #tpu.memory_space<vmem>>, %arg12: memref<1x128xf32, #tpu.memory_space<vmem>>, %arg13: memref<128x128xf32, #tpu.memory_space<vmem>>, %arg14: memref<1x128xf32, #tpu.memory_space<vmem>>, %arg15: memref<128x128xf32, #tpu.memory_space<vmem>>, %arg16: memref<1x128xf32, #tpu.memory_space<vmem>>, %arg17: memref<8x128xf32, #tpu.memory_space<vmem>>, %arg18: memref<8x128xf32, #tpu.memory_space<vmem>>, %arg19: memref<8x128xf32, #tpu.memory_space<vmem>>, %arg20: memref<8x128xf32, #tpu.memory_space<vmem>>) attributes {dimension_semantics = [#tpu.dimension_semantics<arbitrary>], iteration_bounds = array<i64: 1>, scalar_prefetch = 0 : i64, scratch_operands = 0 : i64, tpu.core_type = #tpu.core_type<tc>, window_params = [{pipeline_mode = #tpu.pipeline_mode<synchronous>, transform_indices = @transform_0, window_bounds = array<i64: 8, 128>}, {pipeline_mode = #tpu.pipeline_mode<synchronous>, transform_indices = @transform_1, window_bounds = array<i64: 8, 128>}, {pipeline_mode = #tpu.pipeline_mode<synchronous>, transform_indices = @transform_2, window_bounds = array<i64: 128, 128>}, {pipeline_mode = #tpu.pipeline_mode<synchronous>, transform_indices = @transform_3, window_bounds = array<i64: 1, 128>}, {pipeline_mode = #tpu.pipeline_mode<synchronous>, transform_indices = @transform_4, window_bounds = array<i64: 128, 256>}, {pipeline_mode = #tpu.pipeline_mode<synchronous>, transform_indices = @transform_5, window_bounds = array<i64: 1, 256>}, {pipeline_mode = #tpu.pipeline_mode<synchronous>, transform_indices = @transform_6, window_bounds = array<i64: 128, 128>}, {pipeline_mode = #tpu.pipeline_mode<synchronous>, transform_indices = @transform_7, window_bounds = array<i64: 1, 128>}, {pipeline_mode = #tpu.pipeline_mode<synchronous>, transform_indices = @transform_8, window_bounds = array<i64: 128, 128>}, {pipeline_mode = #tpu.pipeline_mode<synchronous>, transform_indices = @transform_9, window_bounds = array<i64: 1, 128>}, {pipeline_mode = #tpu.pipeline_mode<synchronous>, transform_indices = @transform_10, window_bounds = array<i64: 128, 128>}, {pipeline_mode = #tpu.pipeline_mode<synchronous>, transform_indices = @transform_11, window_bounds = array<i64: 1, 128>}, {pipeline_mode = #tpu.pipeline_mode<synchronous>, transform_indices = @transform_12, window_bounds = array<i64: 128, 128>}, {pipeline_mode = #tpu.pipeline_mode<synchronous>, transform_indices = @transform_13, window_bounds = array<i64: 1, 128>}, {pipeline_mode = #tpu.pipeline_mode<synchronous>, transform_indices = @transform_14, window_bounds = array<i64: 128, 128>}, {pipeline_mode = #tpu.pipeline_mode<synchronous>, transform_indices = @transform_15, window_bounds = array<i64: 1, 128>}, {pipeline_mode = #tpu.pipeline_mode<synchronous>, transform_indices = @transform_16, window_bounds = array<i64: 8, 128>}, {pipeline_mode = #tpu.pipeline_mode<synchronous>, transform_indices = @transform_17, window_bounds = array<i64: 8, 128>}, {pipeline_mode = #tpu.pipeline_mode<synchronous>, transform_indices = @transform_18, window_bounds = array<i64: 8, 128>}, {pipeline_mode = #tpu.pipeline_mode<synchronous>, transform_indices = @transform_19, window_bounds = array<i64: 8, 128>}]} {
    %c0 = arith.constant 0 : index
    %c0_0 = arith.constant 0 : index
    %0 = vector.load %arg1[%c0, %c0_0] : memref<8x128xf32, #tpu.memory_space<vmem>>, vector<8x128xf32>
    %c0_1 = arith.constant 0 : index
    %c0_2 = arith.constant 0 : index
    %1 = vector.load %arg2[%c0_1, %c0_2] : memref<8x128xf32, #tpu.memory_space<vmem>>, vector<8x128xf32>
    %c0_3 = arith.constant 0 : index
    %c0_4 = arith.constant 0 : index
    %2 = vector.load %arg3[%c0_3, %c0_4] : memref<128x128xf32, #tpu.memory_space<vmem>>, vector<128x128xf32>
    %cst = arith.constant dense<0.000000e+00> : vector<8x128xf32>
    %3 = tpu.matmul %0, %2, %cst {dimension_numbers = #tpu.dot_dimension_numbers<[1], [0], [0], [1], [0, 0, 1, 1], [], []>} : vector<8x128xf32>, vector<128x128xf32>, vector<8x128xf32> -> vector<8x128xf32>
    %c0_5 = arith.constant 0 : index
    %c0_6 = arith.constant 0 : index
    %4 = vector.load %arg4[%c0_5, %c0_6] : memref<1x128xf32, #tpu.memory_space<vmem>>, vector<1x128xf32>
    %5 = vector.broadcast %4 : vector<1x128xf32> to vector<8x128xf32>
    %6 = arith.addf %3, %5 : vector<8x128xf32>
    %cst_7 = arith.constant 0.000000e+00 : f32
    %7 = vector.broadcast %cst_7 : f32 to vector<8x128xf32>
    %8 = arith.maximumf %6, %7 : vector<8x128xf32>
    %c0_8 = arith.constant 0 : index
    %c0_9 = arith.constant 0 : index
    %9 = vector.load %arg5[%c0_8, %c0_9] : memref<128x256xf32, #tpu.memory_space<vmem>>, vector<128x256xf32>
    %cst_10 = arith.constant dense<0.000000e+00> : vector<8x256xf32>
    %10 = tpu.matmul %8, %9, %cst_10 {dimension_numbers = #tpu.dot_dimension_numbers<[1], [0], [0], [1], [0, 0, 1, 1], [], []>} : vector<8x128xf32>, vector<128x256xf32>, vector<8x256xf32> -> vector<8x256xf32>
    %c0_11 = arith.constant 0 : index
    %c0_12 = arith.constant 0 : index
    %11 = vector.load %arg6[%c0_11, %c0_12] : memref<1x256xf32, #tpu.memory_space<vmem>>, vector<1x256xf32>
    %12 = vector.broadcast %11 : vector<1x256xf32> to vector<8x256xf32>
    %13 = arith.addf %10, %12 : vector<8x256xf32>
    %14 = vector.extract_strided_slice %13 {offsets = [0, 0], sizes = [8, 128], strides = [1, 1]} : vector<8x256xf32> to vector<8x128xf32>
    %15 = vector.extract_strided_slice %13 {offsets = [0, 128], sizes = [8, 128], strides = [1, 1]} : vector<8x256xf32> to vector<8x128xf32>
    %cst_13 = arith.constant 5.000000e-01 : f32
    %16 = vector.broadcast %cst_13 : f32 to vector<8x128xf32>
    %17 = arith.mulf %16, %15 : vector<8x128xf32>
    %18 = math.exp %17 : vector<8x128xf32>
    %19 = arith.mulf %18, %1 : vector<8x128xf32>
    %20 = arith.addf %14, %19 : vector<8x128xf32>
    %c0_14 = arith.constant 0 : index
    %c0_15 = arith.constant 0 : index
    %21 = vector.load %arg7[%c0_14, %c0_15] : memref<128x128xf32, #tpu.memory_space<vmem>>, vector<128x128xf32>
    %cst_16 = arith.constant dense<0.000000e+00> : vector<8x128xf32>
    %22 = tpu.matmul %20, %21, %cst_16 {dimension_numbers = #tpu.dot_dimension_numbers<[1], [0], [0], [1], [0, 0, 1, 1], [], []>} : vector<8x128xf32>, vector<128x128xf32>, vector<8x128xf32> -> vector<8x128xf32>
    %c0_17 = arith.constant 0 : index
    %c0_18 = arith.constant 0 : index
    %23 = vector.load %arg8[%c0_17, %c0_18] : memref<1x128xf32, #tpu.memory_space<vmem>>, vector<1x128xf32>
    %24 = vector.broadcast %23 : vector<1x128xf32> to vector<8x128xf32>
    %25 = arith.addf %22, %24 : vector<8x128xf32>
    %26 = tpu.iota {dimensions = array<i32: 1>} : vector<8x128xi32>
    %c8_i32 = arith.constant 8 : i32
    %27 = vector.broadcast %c8_i32 : i32 to vector<8x128xi32>
    %28 = arith.cmpi slt, %26, %27 : vector<8x128xi32>
    %cst_19 = arith.constant -1.000000e+30 : f32
    %29 = vector.broadcast %cst_19 : f32 to vector<8x128xf32>
    %30 = arith.select %28, %25, %29 : vector<8x128xi1>, vector<8x128xf32>
    %cst_20 = arith.constant dense<0xFF800000> : vector<8xf32>
    %31 = vector.multi_reduction <maximumf>, %30, %cst_20 [1] : vector<8x128xf32> to vector<8xf32>
    %32 = vector.shape_cast %31 : vector<8xf32> to vector<8x1xf32>
    %33 = vector.broadcast %32 : vector<8x1xf32> to vector<8x128xf32>
    %34 = arith.subf %30, %33 : vector<8x128xf32>
    %35 = math.exp %34 : vector<8x128xf32>
    %cst_21 = arith.constant dense<0.000000e+00> : vector<8xf32>
    %36 = vector.multi_reduction <add>, %35, %cst_21 [1] : vector<8x128xf32> to vector<8xf32>
    %37 = vector.shape_cast %36 : vector<8xf32> to vector<8x1xf32>
    %38 = tpu.reciprocal %37 {approx = true} : vector<8x1xf32> -> vector<8x1xf32>
    %39 = vector.broadcast %38 : vector<8x1xf32> to vector<8x128xf32>
    %40 = arith.mulf %35, %39 : vector<8x128xf32>
    %c0_22 = arith.constant 0 : index
    %c0_23 = arith.constant 0 : index
    %41 = vector.load %arg9[%c0_22, %c0_23] : memref<128x128xf32, #tpu.memory_space<vmem>>, vector<128x128xf32>
    %cst_24 = arith.constant dense<0.000000e+00> : vector<8x128xf32>
    %42 = tpu.matmul %40, %41, %cst_24 {dimension_numbers = #tpu.dot_dimension_numbers<[1], [0], [0], [1], [0, 0, 1, 1], [], []>} : vector<8x128xf32>, vector<128x128xf32>, vector<8x128xf32> -> vector<8x128xf32>
    %c0_25 = arith.constant 0 : index
    %c0_26 = arith.constant 0 : index
    %43 = vector.load %arg10[%c0_25, %c0_26] : memref<1x128xf32, #tpu.memory_space<vmem>>, vector<1x128xf32>
    %44 = vector.broadcast %43 : vector<1x128xf32> to vector<8x128xf32>
    %45 = arith.addf %42, %44 : vector<8x128xf32>
    %cst_27 = arith.constant 0.000000e+00 : f32
    %46 = vector.broadcast %cst_27 : f32 to vector<8x128xf32>
    %47 = arith.maximumf %45, %46 : vector<8x128xf32>
    %c0_28 = arith.constant 0 : index
    %c0_29 = arith.constant 0 : index
    %48 = vector.load %arg11[%c0_28, %c0_29] : memref<128x128xf32, #tpu.memory_space<vmem>>, vector<128x128xf32>
    %cst_30 = arith.constant dense<0.000000e+00> : vector<8x128xf32>
    %49 = tpu.matmul %47, %48, %cst_30 {dimension_numbers = #tpu.dot_dimension_numbers<[1], [0], [0], [1], [0, 0, 1, 1], [], []>} : vector<8x128xf32>, vector<128x128xf32>, vector<8x128xf32> -> vector<8x128xf32>
    %c0_31 = arith.constant 0 : index
    %c0_32 = arith.constant 0 : index
    %50 = vector.load %arg12[%c0_31, %c0_32] : memref<1x128xf32, #tpu.memory_space<vmem>>, vector<1x128xf32>
    %51 = vector.broadcast %50 : vector<1x128xf32> to vector<8x128xf32>
    %52 = arith.addf %49, %51 : vector<8x128xf32>
    %53 = tpu.iota {dimensions = array<i32: 1>} : vector<8x128xi32>
    %c32_i32 = arith.constant 32 : i32
    %54 = vector.broadcast %c32_i32 : i32 to vector<8x128xi32>
    %55 = arith.cmpi slt, %53, %54 : vector<8x128xi32>
    %cst_33 = arith.constant -1.000000e+30 : f32
    %56 = vector.broadcast %cst_33 : f32 to vector<8x128xf32>
    %57 = arith.select %55, %52, %56 : vector<8x128xi1>, vector<8x128xf32>
    %cst_34 = arith.constant dense<0xFF800000> : vector<8xf32>
    %58 = vector.multi_reduction <maximumf>, %57, %cst_34 [1] : vector<8x128xf32> to vector<8xf32>
    %59 = vector.shape_cast %58 : vector<8xf32> to vector<8x1xf32>
    %60 = vector.broadcast %59 : vector<8x1xf32> to vector<8x128xf32>
    %61 = arith.subf %57, %60 : vector<8x128xf32>
    %62 = math.exp %61 : vector<8x128xf32>
    %cst_35 = arith.constant dense<0.000000e+00> : vector<8xf32>
    %63 = vector.multi_reduction <add>, %62, %cst_35 [1] : vector<8x128xf32> to vector<8xf32>
    %64 = vector.shape_cast %63 : vector<8xf32> to vector<8x1xf32>
    %65 = tpu.reciprocal %64 {approx = true} : vector<8x1xf32> -> vector<8x1xf32>
    %66 = vector.broadcast %65 : vector<8x1xf32> to vector<8x128xf32>
    %67 = arith.mulf %62, %66 : vector<8x128xf32>
    %c0_36 = arith.constant 0 : index
    %c0_37 = arith.constant 0 : index
    %68 = vector.load %arg13[%c0_36, %c0_37] : memref<128x128xf32, #tpu.memory_space<vmem>>, vector<128x128xf32>
    %cst_38 = arith.constant dense<0.000000e+00> : vector<8x128xf32>
    %69 = tpu.matmul %67, %68, %cst_38 {dimension_numbers = #tpu.dot_dimension_numbers<[1], [0], [0], [1], [0, 0, 1, 1], [], []>} : vector<8x128xf32>, vector<128x128xf32>, vector<8x128xf32> -> vector<8x128xf32>
    %c0_39 = arith.constant 0 : index
    %c0_40 = arith.constant 0 : index
    %70 = vector.load %arg14[%c0_39, %c0_40] : memref<1x128xf32, #tpu.memory_space<vmem>>, vector<1x128xf32>
    %71 = vector.broadcast %70 : vector<1x128xf32> to vector<8x128xf32>
    %72 = arith.addf %69, %71 : vector<8x128xf32>
    %cst_41 = arith.constant 0.000000e+00 : f32
    %73 = vector.broadcast %cst_41 : f32 to vector<8x128xf32>
    %74 = arith.maximumf %72, %73 : vector<8x128xf32>
    %c0_42 = arith.constant 0 : index
    %c0_43 = arith.constant 0 : index
    %75 = vector.load %arg15[%c0_42, %c0_43] : memref<128x128xf32, #tpu.memory_space<vmem>>, vector<128x128xf32>
    %cst_44 = arith.constant dense<0.000000e+00> : vector<8x128xf32>
    %76 = tpu.matmul %74, %75, %cst_44 {dimension_numbers = #tpu.dot_dimension_numbers<[1], [0], [0], [1], [0, 0, 1, 1], [], []>} : vector<8x128xf32>, vector<128x128xf32>, vector<8x128xf32> -> vector<8x128xf32>
    %c0_45 = arith.constant 0 : index
    %c0_46 = arith.constant 0 : index
    %77 = vector.load %arg16[%c0_45, %c0_46] : memref<1x128xf32, #tpu.memory_space<vmem>>, vector<1x128xf32>
    %78 = vector.broadcast %77 : vector<1x128xf32> to vector<8x128xf32>
    %79 = arith.addf %76, %78 : vector<8x128xf32>
    %cst_47 = arith.constant 0.000000e+00 : f32
    %80 = vector.broadcast %cst_47 : f32 to vector<8x128xf32>
    %81 = arith.maximumf %79, %80 : vector<8x128xf32>
    %c0_48 = arith.constant 0 : index
    %c0_49 = arith.constant 0 : index
    %82 = vector.load %arg17[%c0_48, %c0_49] : memref<8x128xf32, #tpu.memory_space<vmem>>, vector<8x128xf32>
    tpu.vector_store %arg17[%c0_48, %c0_49], %52 {strides = array<i32>} : memref<8x128xf32, #tpu.memory_space<vmem>>, vector<8x128xf32>,
    %c0_50 = arith.constant 0 : index
    %c0_51 = arith.constant 0 : index
    %83 = vector.load %arg18[%c0_50, %c0_51] : memref<8x128xf32, #tpu.memory_space<vmem>>, vector<8x128xf32>
    tpu.vector_store %arg18[%c0_50, %c0_51], %81 {strides = array<i32>} : memref<8x128xf32, #tpu.memory_space<vmem>>, vector<8x128xf32>,
    %c0_52 = arith.constant 0 : index
    %c0_53 = arith.constant 0 : index
    %84 = vector.load %arg19[%c0_52, %c0_53] : memref<8x128xf32, #tpu.memory_space<vmem>>, vector<8x128xf32>
    tpu.vector_store %arg19[%c0_52, %c0_53], %14 {strides = array<i32>} : memref<8x128xf32, #tpu.memory_space<vmem>>, vector<8x128xf32>,
    %c0_54 = arith.constant 0 : index
    %c0_55 = arith.constant 0 : index
    %85 = vector.load %arg20[%c0_54, %c0_55] : memref<8x128xf32, #tpu.memory_space<vmem>>, vector<8x128xf32>
    tpu.vector_store %arg20[%c0_54, %c0_55], %15 {strides = array<i32>} : memref<8x128xf32, #tpu.memory_space<vmem>>, vector<8x128xf32>,
    return
  }
  func.func @transform_0(%arg0: i32) -> (i32, i32) {
    %c0_i32 = arith.constant 0 : i32
    %c0_i32_0 = arith.constant 0 : i32
    %c0_i32_1 = arith.constant 0 : i32
    return %c0_i32, %c0_i32_0 : i32, i32
  }
  func.func @transform_1(%arg0: i32) -> (i32, i32) {
    %c0_i32 = arith.constant 0 : i32
    %c0_i32_0 = arith.constant 0 : i32
    %c0_i32_1 = arith.constant 0 : i32
    return %c0_i32, %c0_i32_0 : i32, i32
  }
  func.func @transform_2(%arg0: i32) -> (i32, i32) {
    %c0_i32 = arith.constant 0 : i32
    %c0_i32_0 = arith.constant 0 : i32
    %c0_i32_1 = arith.constant 0 : i32
    return %c0_i32, %c0_i32_0 : i32, i32
  }
  func.func @transform_3(%arg0: i32) -> (i32, i32) {
    %c0_i32 = arith.constant 0 : i32
    %c0_i32_0 = arith.constant 0 : i32
    %c0_i32_1 = arith.constant 0 : i32
    return %c0_i32, %c0_i32_0 : i32, i32
  }
  func.func @transform_4(%arg0: i32) -> (i32, i32) {
    %c0_i32 = arith.constant 0 : i32
    %c0_i32_0 = arith.constant 0 : i32
    %c0_i32_1 = arith.constant 0 : i32
    return %c0_i32, %c0_i32_0 : i32, i32
  }
  func.func @transform_5(%arg0: i32) -> (i32, i32) {
    %c0_i32 = arith.constant 0 : i32
    %c0_i32_0 = arith.constant 0 : i32
    %c0_i32_1 = arith.constant 0 : i32
    return %c0_i32, %c0_i32_0 : i32, i32
  }
  func.func @transform_6(%arg0: i32) -> (i32, i32) {
    %c0_i32 = arith.constant 0 : i32
    %c0_i32_0 = arith.constant 0 : i32
    %c0_i32_1 = arith.constant 0 : i32
    return %c0_i32, %c0_i32_0 : i32, i32
  }
  func.func @transform_7(%arg0: i32) -> (i32, i32) {
    %c0_i32 = arith.constant 0 : i32
    %c0_i32_0 = arith.constant 0 : i32
    %c0_i32_1 = arith.constant 0 : i32
    return %c0_i32, %c0_i32_0 : i32, i32
  }
  func.func @transform_8(%arg0: i32) -> (i32, i32) {
    %c0_i32 = arith.constant 0 : i32
    %c0_i32_0 = arith.constant 0 : i32
    %c0_i32_1 = arith.constant 0 : i32
    return %c0_i32, %c0_i32_0 : i32, i32
  }
  func.func @transform_9(%arg0: i32) -> (i32, i32) {
    %c0_i32 = arith.constant 0 : i32
    %c0_i32_0 = arith.constant 0 : i32
    %c0_i32_1 = arith.constant 0 : i32
    return %c0_i32, %c0_i32_0 : i32, i32
  }
  func.func @transform_10(%arg0: i32) -> (i32, i32) {
    %c0_i32 = arith.constant 0 : i32
    %c0_i32_0 = arith.constant 0 : i32
    %c0_i32_1 = arith.constant 0 : i32
    return %c0_i32, %c0_i32_0 : i32, i32
  }
  func.func @transform_11(%arg0: i32) -> (i32, i32) {
    %c0_i32 = arith.constant 0 : i32
    %c0_i32_0 = arith.constant 0 : i32
    %c0_i32_1 = arith.constant 0 : i32
    return %c0_i32, %c0_i32_0 : i32, i32
  }
  func.func @transform_12(%arg0: i32) -> (i32, i32) {
    %c0_i32 = arith.constant 0 : i32
    %c0_i32_0 = arith.constant 0 : i32
    %c0_i32_1 = arith.constant 0 : i32
    return %c0_i32, %c0_i32_0 : i32, i32
  }
  func.func @transform_13(%arg0: i32) -> (i32, i32) {
    %c0_i32 = arith.constant 0 : i32
    %c0_i32_0 = arith.constant 0 : i32
    %c0_i32_1 = arith.constant 0 : i32
    return %c0_i32, %c0_i32_0 : i32, i32
  }
  func.func @transform_14(%arg0: i32) -> (i32, i32) {
    %c0_i32 = arith.constant 0 : i32
    %c0_i32_0 = arith.constant 0 : i32
    %c0_i32_1 = arith.constant 0 : i32
    return %c0_i32, %c0_i32_0 : i32, i32
  }
  func.func @transform_15(%arg0: i32) -> (i32, i32) {
    %c0_i32 = arith.constant 0 : i32
    %c0_i32_0 = arith.constant 0 : i32
    %c0_i32_1 = arith.constant 0 : i32
    return %c0_i32, %c0_i32_0 : i32, i32
  }
  func.func @transform_16(%arg0: i32) -> (i32, i32) {
    %c0_i32 = arith.constant 0 : i32
    %c0_i32_0 = arith.constant 0 : i32
    %c0_i32_1 = arith.constant 0 : i32
    return %c0_i32, %c0_i32_0 : i32, i32
  }
  func.func @transform_17(%arg0: i32) -> (i32, i32) {
    %c0_i32 = arith.constant 0 : i32
    %c0_i32_0 = arith.constant 0 : i32
    %c0_i32_1 = arith.constant 0 : i32
    return %c0_i32, %c0_i32_0 : i32, i32
  }
  func.func @transform_18(%arg0: i32) -> (i32, i32) {
    %c0_i32 = arith.constant 0 : i32
    %c0_i32_0 = arith.constant 0 : i32
    %c0_i32_1 = arith.constant 0 : i32
    return %c0_i32, %c0_i32_0 : i32, i32
  }
  func.func @transform_19(%arg0: i32) -> (i32, i32) {
    %c0_i32 = arith.constant 0 : i32
    %c0_i32_0 = arith.constant 0 : i32
    %c0_i32_1 = arith.constant 0 : i32
    return %c0_i32, %c0_i32_0 : i32, i32
  }
}

</mosaic_0001>

<llo_original>
// kernel: tpu_custom_call.1
$region0: #{tpu_custom_call.1}
  #allocation0 [shape = 'u32[]', space=smem, size = 0x4, offset = 0x4, fixed_abs, tag = 'smem constant byte address 0x4 - core index']
  #allocation1 [shape = 'u32[144,128]{1,0:T(1,128)}', space=vmem, size = 0x12000, scoped, tag = 'internal scratch']
  %s0 = inlined_call_operand.hbm [shape: f32[8,128], index: 0, kind: input, shape index: {}]
  %s1 = inlined_call_operand.hbm [shape: f32[8,128], index: 1, kind: input, shape index: {}]
  %s2 = inlined_call_operand.hbm [shape: f32[128,128], index: 2, kind: input, shape index: {}]
  %s3 = inlined_call_operand.vmem [shape: f32[1,128], index: 3, kind: input, shape index: {}]
  %s4 = inlined_call_operand.hbm [shape: f32[128,256], index: 4, kind: input, shape index: {}]
  %s5 = inlined_call_operand.vmem [shape: f32[1,256], index: 5, kind: input, shape index: {}]
  %s6 = inlined_call_operand.hbm [shape: f32[128,128], index: 6, kind: input, shape index: {}]
  %s7 = inlined_call_operand.vmem [shape: f32[1,128], index: 7, kind: input, shape index: {}]
  %s8 = inlined_call_operand.hbm [shape: f32[128,128], index: 8, kind: input, shape index: {}]
  %s9 = inlined_call_operand.vmem [shape: f32[1,128], index: 9, kind: input, shape index: {}]
  %s10 = inlined_call_operand.hbm [shape: f32[128,128], index: 10, kind: input, shape index: {}]
  %s11 = inlined_call_operand.vmem [shape: f32[1,128], index: 11, kind: input, shape index: {}]
  %s12 = inlined_call_operand.hbm [shape: f32[128,128], index: 12, kind: input, shape index: {}]
  %s13 = inlined_call_operand.vmem [shape: f32[1,128], index: 13, kind: input, shape index: {}]
  %s14 = inlined_call_operand.hbm [shape: f32[128,128], index: 14, kind: input, shape index: {}]
  %s15 = inlined_call_operand.vmem [shape: f32[1,128], index: 15, kind: input, shape index: {}]
  %s16 = inlined_call_operand.hbm [shape: f32[8,128], index: 16, kind: output, shape index: {0}]
  %s17 = inlined_call_operand.hbm [shape: f32[8,128], index: 17, kind: output, shape index: {1}]
  %s18 = inlined_call_operand.hbm [shape: f32[8,128], index: 18, kind: output, shape index: {2}]
  %s19 = inlined_call_operand.hbm [shape: f32[8,128], index: 19, kind: output, shape index: {3}]
  %20 = xla_tuple %s16, %s17, %s18, %s19
  %s21 = sld [smem:[#allocation0]]
  $region134: #{tpu_custom_call.1} parent=0
    _
  %s23 = ssub.s32 1, %s21
  %s24 = scalar_select 0, %s23, %s21
  $region1: #{tpu_custom_call.1} parent=0
    #allocation2 [shape = 'u8[4096]{0}', space=vmem, size = 0x1000, scoped, tag = 'input window, operand 0, single buffered']
    #allocation3 [shape = 's32[1]{0}', space=sflag, size = 0x4, scoped, tag = 'scoped memory for tpu_custom_call.1']
    #allocation4 [shape = 's32[1]{0}', space=sflag, size = 0x4, scoped, tag = 'scoped memory for tpu_custom_call.1']
    #allocation5 [shape = 'u8[4096]{0}', space=vmem, size = 0x1000, scoped, tag = 'input window, operand 1, single buffered']
    #allocation6 [shape = 's32[1]{0}', space=sflag, size = 0x4, scoped, tag = 'scoped memory for tpu_custom_call.1']
    #allocation7 [shape = 'u8[65536]{0}', space=vmem, size = 0x10000, scoped, tag = 'input window, operand 2, single buffered']
    #allocation8 [shape = 'u8[131072]{0}', space=vmem, size = 0x20000, scoped, tag = 'input window, operand 4, single buffered']
    #allocation9 [shape = 's32[1]{0}', space=sflag, size = 0x4, scoped, tag = 'scoped memory for tpu_custom_call.1']
    #allocation10 [shape = 'u8[65536]{0}', space=vmem, size = 0x10000, scoped, tag = 'input window, operand 6, single buffered']
    #allocation11 [shape = 'u8[65536]{0}', space=vmem, size = 0x10000, scoped, tag = 'input window, operand 8, single buffered']
    #allocation12 [shape = 's32[1]{0}', space=sflag, size = 0x4, scoped, tag = 'scoped memory for tpu_custom_call.1']
    #allocation13 [shape = 'u8[65536]{0}', space=vmem, size = 0x10000, scoped, tag = 'input window, operand 10, single buffered']
    #allocation14 [shape = 'u8[65536]{0}', space=vmem, size = 0x10000, scoped, tag = 'input window, operand 12, single buffered']
    #allocation15 [shape = 's32[1]{0}', space=sflag, size = 0x4, scoped, tag = 'scoped memory for tpu_custom_call.1']
    #allocation16 [shape = 'u8[65536]{0}', space=vmem, size = 0x10000, scoped, tag = 'input window, operand 14, single buffered']
    #allocation17 [shape = 'u8[4096]{0}', space=vmem, size = 0x1000, scoped, tag = 'output window, operand 0, single buffered']
    #allocation18 [shape = 'u8[4096]{0}', space=vmem, size = 0x1000, scoped, tag = 'output window, operand 1, single buffered']
    #allocation19 [shape = 's32[1]{0}', space=sflag, size = 0x4, scoped, tag = 'scoped memory for tpu_custom_call.1']
    #allocation20 [shape = 'u8[4096]{0}', space=vmem, size = 0x1000, scoped, tag = 'output window, operand 2, single buffered']
    #allocation21 [shape = 'u8[4096]{0}', space=vmem, size = 0x1000, scoped, tag = 'output window, operand 3, single buffered']
    #allocation22 [shape = 's32[1]{0}', space=sflag, size = 0x4, scoped, tag = 'scoped memory for tpu_custom_call.1']
    %25 = vsyncpa [#allocation3], 0
    %26 = vsyncpa [#allocation6], 0
    %27 = vsyncpa [#allocation9], 0
    %28 = vsyncpa [#allocation12], 0
    %29 = vsyncpa [#allocation15], 0
    %30 = vsyncpa [#allocation4], 0
    %31 = vsyncpa [#allocation19], 0
    %32 = vsyncpa [#allocation22], 0
    // Predicated region
    $region2: #{tpu_custom_call.1} parent=1 // pred_check
      _
    $region3: #{tpu_custom_call.1} parent=1 // pred_check_branch
      %34 = sbr.rel (0) target = $region5
    $region4: #{tpu_custom_call.1} parent=1 // pred_region
      %s36 = ssub.s32 128, 128
      %37 = vsyncadd [#allocation3], %s36
      %s39 = sshll.u32 [#allocation2], 4
      %s40 = int_to_ptr.vmem [resolvable:$true] %s39
      %42 = dma.hbm_to_vmem [thread:$0]  %s0, 128, %s40, [#allocation3]
    $region5: #{tpu_custom_call.1} parent=1 // pred_fallthru
      _
    // Predicated region
    $region6: #{tpu_custom_call.1} parent=1 // pred_check
      _
    $region7: #{tpu_custom_call.1} parent=1 // pred_check_branch
      %44 = sbr.rel (0) target = $region9
    $region8: #{tpu_custom_call.1} parent=1 // pred_region
      %s46 = ssub.s32 128, 128
      %47 = vsyncadd [#allocation6], %s46
      %s49 = sshll.u32 [#allocation5], 4
      %s50 = int_to_ptr.vmem [resolvable:$true] %s49
      %52 = dma.hbm_to_vmem [thread:$0]  %s1, 128, %s50, [#allocation6]
    $region9: #{tpu_custom_call.1} parent=1 // pred_fallthru
      _
    // Predicated region
    $region10: #{tpu_custom_call.1} parent=1 // pred_check
      _
    $region11: #{tpu_custom_call.1} parent=1 // pred_check_branch
      %54 = sbr.rel (0) target = $region13
    $region12: #{tpu_custom_call.1} parent=1 // pred_region
      %s56 = ssub.s32 2048, 2048
      %57 = vsyncadd [#allocation6], %s56
      %s58 = sshll.u32 [#allocation7], 4
      %s59 = int_to_ptr.vmem [resolvable:$true] %s58
      %64 = dma.hbm_to_vmem [thread:$0]  %s2, 2048, %s59, [#allocation6], 128, 128, 8
    $region13: #{tpu_custom_call.1} parent=1 // pred_fallthru
      _
    // Predicated region
    $region14: #{tpu_custom_call.1} parent=1 // pred_check
      _
    $region15: #{tpu_custom_call.1} parent=1 // pred_check_branch
      %66 = sbr.rel (0) target = $region17
    $region16: #{tpu_custom_call.1} parent=1 // pred_region
      _
    $region17: #{tpu_custom_call.1} parent=1 // pred_fallthru
      _
    // Predicated region
    $region18: #{tpu_custom_call.1} parent=1 // pred_check
      _
    $region19: #{tpu_custom_call.1} parent=1 // pred_check_branch
      %68 = sbr.rel (0) target = $region21
    $region20: #{tpu_custom_call.1} parent=1 // pred_region
      %s70 = ssub.s32 4096, 4096
      %71 = vsyncadd [#allocation9], %s70
      %s72 = sshll.u32 [#allocation8], 4
      %s73 = int_to_ptr.vmem [resolvable:$true] %s72
      %78 = dma.hbm_to_vmem [thread:$0]  %s4, 4096, %s73, [#allocation9], 256, 256, 16
    $region21: #{tpu_custom_call.1} parent=1 // pred_fallthru
      _
    // Predicated region
    $region22: #{tpu_custom_call.1} parent=1 // pred_check
      _
    $region23: #{tpu_custom_call.1} parent=1 // pred_check_branch
      %80 = sbr.rel (0) target = $region25
    $region24: #{tpu_custom_call.1} parent=1 // pred_region
      _
    $region25: #{tpu_custom_call.1} parent=1 // pred_fallthru
      _
    // Predicated region
    $region26: #{tpu_custom_call.1} parent=1 // pred_check
      _
    $region27: #{tpu_custom_call.1} parent=1 // pred_check_branch
      %82 = sbr.rel (0) target = $region29
    $region28: #{tpu_custom_call.1} parent=1 // pred_region
      %s84 = ssub.s32 2048, 2048
      %85 = vsyncadd [#allocation9], %s84
      %s86 = sshll.u32 [#allocation10], 4
      %s87 = int_to_ptr.vmem [resolvable:$true] %s86
      %92 = dma.hbm_to_vmem [thread:$0]  %s6, 2048, %s87, [#allocation9], 128, 128, 8
    $region29: #{tpu_custom_call.1} parent=1 // pred_fallthru
      _
    // Predicated region
    $region30: #{tpu_custom_call.1} parent=1 // pred_check
      _
    $region31: #{tpu_custom_call.1} parent=1 // pred_check_branch
      %94 = sbr.rel (0) target = $region33
    $region32: #{tpu_custom_call.1} parent=1 // pred_region
      _
    $region33: #{tpu_custom_call.1} parent=1 // pred_fallthru
      _
    // Predicated region
    $region34: #{tpu_custom_call.1} parent=1 // pred_check
      _
    $region35: #{tpu_custom_call.1} parent=1 // pred_check_branch
      %96 = sbr.rel (0) target = $region37
    $region36: #{tpu_custom_call.1} parent=1 // pred_region
      %s98 = ssub.s32 2048, 2048
      %99 = vsyncadd [#allocation12], %s98
      %s100 = sshll.u32 [#allocation11], 4
      %s101 = int_to_ptr.vmem [resolvable:$true] %s100
      %106 = dma.hbm_to_vmem [thread:$0]  %s8, 2048, %s101, [#allocation12], 128, 128, 8
    $region37: #{tpu_custom_call.1} parent=1 // pred_fallthru
      _
    // Predicated region
    $region38: #{tpu_custom_call.1} parent=1 // pred_check
      _
    $region39: #{tpu_custom_call.1} parent=1 // pred_check_branch
      %108 = sbr.rel (0) target = $region41
    $region40: #{tpu_custom_call.1} parent=1 // pred_region
      _
    $region41: #{tpu_custom_call.1} parent=1 // pred_fallthru
      _
    // Predicated region
    $region42: #{tpu_custom_call.1} parent=1 // pred_check
      _
    $region43: #{tpu_custom_call.1} parent=1 // pred_check_branch
      %110 = sbr.rel (0) target = $region45
    $region44: #{tpu_custom_call.1} parent=1 // pred_region
      %s112 = ssub.s32 2048, 2048
      %113 = vsyncadd [#allocation12], %s112
      %s114 = sshll.u32 [#allocation13], 4
      %s115 = int_to_ptr.vmem [resolvable:$true] %s114
      %120 = dma.hbm_to_vmem [thread:$0]  %s10, 2048, %s115, [#allocation12], 128, 128, 8
    $region45: #{tpu_custom_call.1} parent=1 // pred_fallthru
      _
    // Predicated region
    $region46: #{tpu_custom_call.1} parent=1 // pred_check
      _
    $region47: #{tpu_custom_call.1} parent=1 // pred_check_branch
      %122 = sbr.rel (0) target = $region49
    $region48: #{tpu_custom_call.1} parent=1 // pred_region
      _
    $region49: #{tpu_custom_call.1} parent=1 // pred_fallthru
      _
    // Predicated region
    $region50: #{tpu_custom_call.1} parent=1 // pred_check
      _
    $region51: #{tpu_custom_call.1} parent=1 // pred_check_branch
      %124 = sbr.rel (0) target = $region53
    $region52: #{tpu_custom_call.1} parent=1 // pred_region
      %s126 = ssub.s32 2048, 2048
      %127 = vsyncadd [#allocation15], %s126
      %s128 = sshll.u32 [#allocation14], 4
      %s129 = int_to_ptr.vmem [resolvable:$true] %s128
      %134 = dma.hbm_to_vmem [thread:$0]  %s12, 2048, %s129, [#allocation15], 128, 128, 8
    $region53: #{tpu_custom_call.1} parent=1 // pred_fallthru
      _
    // Predicated region
    $region54: #{tpu_custom_call.1} parent=1 // pred_check
      _
    $region55: #{tpu_custom_call.1} parent=1 // pred_check_branch
      %136 = sbr.rel (0) target = $region57
    $region56: #{tpu_custom_call.1} parent=1 // pred_region
      _
    $region57: #{tpu_custom_call.1} parent=1 // pred_fallthru
      _
    // Predicated region
    $region58: #{tpu_custom_call.1} parent=1 // pred_check
      _
    $region59: #{tpu_custom_call.1} parent=1 // pred_check_branch
      %138 = sbr.rel (0) target = $region61
    $region60: #{tpu_custom_call.1} parent=1 // pred_region
      %s140 = ssub.s32 2048, 2048
      %141 = vsyncadd [#allocation15], %s140
      %s142 = sshll.u32 [#allocation16], 4
      %s143 = int_to_ptr.vmem [resolvable:$true] %s142
      %148 = dma.hbm_to_vmem [thread:$0]  %s14, 2048, %s143, [#allocation15], 128, 128, 8
    $region61: #{tpu_custom_call.1} parent=1 // pred_fallthru
      _
    // Predicated region
    $region62: #{tpu_custom_call.1} parent=1 // pred_check
      _
    $region63: #{tpu_custom_call.1} parent=1 // pred_check_branch
      %150 = sbr.rel (0) target = $region65
    $region64: #{tpu_custom_call.1} parent=1 // pred_region
      _
    $region65: #{tpu_custom_call.1} parent=1 // pred_fallthru
      _
    // Predicated region
    $region66: #{tpu_custom_call.1} parent=1 // pred_check
      _
    $region67: #{tpu_custom_call.1} parent=1 // pred_check_branch
      %152 = sbr.rel (0) target = $region69
    $region68: #{tpu_custom_call.1} parent=1 // pred_region
      %153 = dma.done [#allocation3], 128
    $region69: #{tpu_custom_call.1} parent=1 // pred_fallthru
      _
    // Predicated region
    $region70: #{tpu_custom_call.1} parent=1 // pred_check
      _
    $region71: #{tpu_custom_call.1} parent=1 // pred_check_branch
      %155 = sbr.rel (0) target = $region73
    $region72: #{tpu_custom_call.1} parent=1 // pred_region
      %156 = dma.done [#allocation6], 128
    $region73: #{tpu_custom_call.1} parent=1 // pred_fallthru
      _
    // Predicated region
    $region74: #{tpu_custom_call.1} parent=1 // pred_check
      _
    $region75: #{tpu_custom_call.1} parent=1 // pred_check_branch
      %158 = sbr.rel (0) target = $region77
    $region76: #{tpu_custom_call.1} parent=1 // pred_region
      %159 = dma.done [#allocation6], 2048
    $region77: #{tpu_custom_call.1} parent=1 // pred_fallthru
      _
    // Predicated region
    $region78: #{tpu_custom_call.1} parent=1 // pred_check
      _
    $region79: #{tpu_custom_call.1} parent=1 // pred_check_branch
      %161 = sbr.rel (0) target = $region81
    $region80: #{tpu_custom_call.1} parent=1 // pred_region
      %162 = dma.done [#allocation9], 4096
    $region81: #{tpu_custom_call.1} parent=1 // pred_fallthru
      _
    // Predicated region
    $region82: #{tpu_custom_call.1} parent=1 // pred_check
      _
    $region83: #{tpu_custom_call.1} parent=1 // pred_check_branch
      %164 = sbr.rel (0) target = $region85
    $region84: #{tpu_custom_call.1} parent=1 // pred_region
      %165 = dma.done [#allocation9], 2048
    $region85: #{tpu_custom_call.1} parent=1 // pred_fallthru
      _
    // Predicated region
    $region86: #{tpu_custom_call.1} parent=1 // pred_check
      _
    $region87: #{tpu_custom_call.1} parent=1 // pred_check_branch
      %167 = sbr.rel (0) target = $region89
    $region88: #{tpu_custom_call.1} parent=1 // pred_region
      %168 = dma.done [#allocation12], 2048
    $region89: #{tpu_custom_call.1} parent=1 // pred_fallthru
      _
    // Predicated region
    $region90: #{tpu_custom_call.1} parent=1 // pred_check
      _
    $region91: #{tpu_custom_call.1} parent=1 // pred_check_branch
      %170 = sbr.rel (0) target = $region93
    $region92: #{tpu_custom_call.1} parent=1 // pred_region
      %171 = dma.done [#allocation12], 2048
    $region93: #{tpu_custom_call.1} parent=1 // pred_fallthru
      _
    // Predicated region
    $region94: #{tpu_custom_call.1} parent=1 // pred_check
      _
    $region95: #{tpu_custom_call.1} parent=1 // pred_check_branch
      %173 = sbr.rel (0) target = $region97
    $region96: #{tpu_custom_call.1} parent=1 // pred_region
      %174 = dma.done [#allocation15], 2048
    $region97: #{tpu_custom_call.1} parent=1 // pred_fallthru
      _
    // Predicated region
    $region98: #{tpu_custom_call.1} parent=1 // pred_check
      _
    $region99: #{tpu_custom_call.1} parent=1 // pred_check_branch
      %176 = sbr.rel (0) target = $region101
    $region100: #{tpu_custom_call.1} parent=1 // pred_region
      %177 = dma.done [#allocation15], 2048
    $region101: #{tpu_custom_call.1} parent=1 // pred_fallthru
      _
    %v178 = vld [vmem:[#allocation2] sm:$0xff]
    %v179 = vld [vmem:[#allocation5] sm:$0xff]
    %v180 = vld [vmem:[#allocation7] sm:$0xff]
    %v181 = vld [vmem:[#allocation7 + $0x8] sm:$0xff]
    %v182 = vld [vmem:[#allocation7 + $0x10] sm:$0xff]
    %v183 = vld [vmem:[#allocation7 + $0x18] sm:$0xff]
    %v184 = vld [vmem:[#allocation7 + $0x20] sm:$0xff]
    %v185 = vld [vmem:[#allocation7 + $0x28] sm:$0xff]
    %v186 = vld [vmem:[#allocation7 + $0x30] sm:$0xff]
    %v187 = vld [vmem:[#allocation7 + $0x38] sm:$0xff]
    %v188 = vld [vmem:[#allocation7 + $0x40] sm:$0xff]
    %v189 = vld [vmem:[#allocation7 + $0x48] sm:$0xff]
    %v190 = vld [vmem:[#allocation7 + $0x50] sm:$0xff]
    %v191 = vld [vmem:[#allocation7 + $0x58] sm:$0xff]
    %v192 = vld [vmem:[#allocation7 + $0x60] sm:$0xff]
    %v193 = vld [vmem:[#allocation7 + $0x68] sm:$0xff]
    %v194 = vld [vmem:[#allocation7 + $0x70] sm:$0xff]
    %v195 = vld [vmem:[#allocation7 + $0x78] sm:$0xff]
    %v196 = vld [vmem:[%s3] sm:$0x1]
    %v198 = vlaneseq
    %v199 = vshrl.u32 %v198, 7
    %v200 = vsub.s32 0, %v199
    %v201 = vrot.slane %v196, %v200
    %203 = vmatprep.subr.mxu0 0.0
    %204 = vmatpush1.msra.mxu0 %v180
    %205 = vmatprep.subr.mxu0 0.0
    %206 = vmatpush1.msra.mxu0 %v181
    %207 = vmatprep.subr.mxu0 0.0
    %208 = vmatpush1.msra.mxu0 %v182
    %209 = vmatprep.subr.mxu0 0.0
    %210 = vmatpush1.msra.mxu0 %v183
    %211 = vmatprep.subr.mxu0 0.0
    %212 = vmatpush1.msra.mxu0 %v184
    %213 = vmatprep.subr.mxu0 0.0
    %214 = vmatpush1.msra.mxu0 %v185
    %215 = vmatprep.subr.mxu0 0.0
    %216 = vmatpush1.msra.mxu0 %v186
    %217 = vmatprep.subr.mxu0 0.0
    %218 = vmatpush1.msra.mxu0 %v187
    %219 = vmatprep.subr.mxu0 0.0
    %220 = vmatpush1.msra.mxu0 %v188
    %221 = vmatprep.subr.mxu0 0.0
    %222 = vmatpush1.msra.mxu0 %v189
    %223 = vmatprep.subr.mxu0 0.0
    %224 = vmatpush1.msra.mxu0 %v190
    %225 = vmatprep.subr.mxu0 0.0
    %226 = vmatpush1.msra.mxu0 %v191
    %227 = vmatprep.subr.mxu0 0.0
    %228 = vmatpush1.msra.mxu0 %v192
    %229 = vmatprep.subr.mxu0 0.0
    %230 = vmatpush1.msra.mxu0 %v193
    %231 = vmatprep.subr.mxu0 0.0
    %232 = vmatpush1.msra.mxu0 %v194
    %233 = vmatprep.subr.mxu0 0.0
    %234 = vmatpush1.msra.mxu0 %v195
    %235 = vmatprep.subr.mxu0 0.0
    %236 = vmatpush1.msra.mxu0 0.0
    %237 = vmatprep.subr.mxu0 0.0
    %238 = vmatpush1.msra.mxu0 0.0
    %239 = vmatprep.subr.mxu0 0.0
    %240 = vmatpush1.msra.mxu0 0.0
    %241 = vmatprep.subr.mxu0 0.0
    %242 = vmatpush1.msra.mxu0 0.0
    %243 = vmatprep.subr.mxu0 0.0
    %244 = vmatpush1.msra.mxu0 0.0
    %245 = vmatprep.subr.mxu0 0.0
    %246 = vmatpush1.msra.mxu0 0.0
    %247 = vmatprep.subr.mxu0 0.0
    %248 = vmatpush1.msra.mxu0 0.0
    %249 = vmatprep.subr.mxu0 0.0
    %250 = vmatpush1.msra.mxu0 0.0
    %251 = vmatprep.subr.mxu0 0.0
    %252 = vmatpush1.msra.mxu0 0.0
    %253 = vmatprep.subr.mxu0 0.0
    %254 = vmatpush1.msra.mxu0 0.0
    %255 = vmatprep.subr.mxu0 0.0
    %256 = vmatpush1.msra.mxu0 0.0
    %257 = vmatprep.subr.mxu0 0.0
    %258 = vmatpush1.msra.mxu0 0.0
    %259 = vmatprep.subr.mxu0 0.0
    %260 = vmatpush1.msra.mxu0 0.0
    %261 = vmatprep.subr.mxu0 0.0
    %262 = vmatpush1.msra.mxu0 0.0
    %263 = vmatprep.subr.mxu0 0.0
    %264 = vmatpush1.msra.mxu0 0.0
    %265 = vmatprep.subr.mxu0 0.0
    %266 = vmatpush1.msra.mxu0 0.0
    %267 = vmatprep.mubr.f32.mxu0 0.0
    %268 = vmatmul.mubr.f32.gmra.mrb[0].mxu0 %v178
    %v269 = vpop.f32.mrb[0].mxu0
    %v270 = vadd.f32 %v201, %v269
    %v271 = vpop.f32.mrb[0].mxu0
    %272 = vdwg.mxu0
    %v273 = vmax.f32 %v270, 0.0
    %v274 = vld [vmem:[#allocation8] sm:$0xff]
    %v275 = vld [vmem:[#allocation8 + $0x8] sm:$0xff]
    %v276 = vld [vmem:[#allocation8 + $0x10] sm:$0xff]
    %v277 = vld [vmem:[#allocation8 + $0x18] sm:$0xff]
    %v278 = vld [vmem:[#allocation8 + $0x20] sm:$0xff]
    %v279 = vld [vmem:[#allocation8 + $0x28] sm:$0xff]
    %v280 = vld [vmem:[#allocation8 + $0x30] sm:$0xff]
    %v281 = vld [vmem:[#allocation8 + $0x38] sm:$0xff]
    %v282 = vld [vmem:[#allocation8 + $0x40] sm:$0xff]
    %v283 = vld [vmem:[#allocation8 + $0x48] sm:$0xff]
    %v284 = vld [vmem:[#allocation8 + $0x50] sm:$0xff]
    %v285 = vld [vmem:[#allocation8 + $0x58] sm:$0xff]
    %v286 = vld [vmem:[#allocation8 + $0x60] sm:$0xff]
    %v287 = vld [vmem:[#allocation8 + $0x68] sm:$0xff]
    %v288 = vld [vmem:[#allocation8 + $0x70] sm:$0xff]
    %v289 = vld [vmem:[#allocation8 + $0x78] sm:$0xff]
    %v290 = vld [vmem:[#allocation8 + $0x80] sm:$0xff]
    %v291 = vld [vmem:[#allocation8 + $0x88] sm:$0xff]
    %v292 = vld [vmem:[#allocation8 + $0x90] sm:$0xff]
    %v293 = vld [vmem:[#allocation8 + $0x98] sm:$0xff]
    %v294 = vld [vmem:[#allocation8 + $0xa0] sm:$0xff]
    %v295 = vld [vmem:[#allocation8 + $0xa8] sm:$0xff]
    %v296 = vld [vmem:[#allocation8 + $0xb0] sm:$0xff]
    %v297 = vld [vmem:[#allocation8 + $0xb8] sm:$0xff]
    %v298 = vld [vmem:[#allocation8 + $0xc0] sm:$0xff]
    %v299 = vld [vmem:[#allocation8 + $0xc8] sm:$0xff]
    %v300 = vld [vmem:[#allocation8 + $0xd0] sm:$0xff]
    %v301 = vld [vmem:[#allocation8 + $0xd8] sm:$0xff]
    %v302 = vld [vmem:[#allocation8 + $0xe0] sm:$0xff]
    %v303 = vld [vmem:[#allocation8 + $0xe8] sm:$0xff]
    %v304 = vld [vmem:[#allocation8 + $0xf0] sm:$0xff]
    %v305 = vld [vmem:[#allocation8 + $0xf8] sm:$0xff]
    %v306 = vld [vmem:[%s5] sm:$0x3]
    %v308 = vlaneseq
    %v309 = vshrl.u32 %v308, 7
    %v310 = vsub.s32 0, %v309
    %v311 = vrot.slane %v306, %v310
    %v312 = vlaneseq
    %v313 = vshrl.u32 %v312, 7
    %v314 = vsub.s32 1, %v313
    %v315 = vrot.slane %v306, %v314
    %318 = vmatprep.subr.mxu0 %v275
    %319 = vmatpush1.msra.mxu0 %v274
    %320 = vmatprep.subr.mxu0 %v277
    %321 = vmatpush1.msra.mxu0 %v276
    %322 = vmatprep.subr.mxu0 %v279
    %323 = vmatpush1.msra.mxu0 %v278
    %324 = vmatprep.subr.mxu0 %v281
    %325 = vmatpush1.msra.mxu0 %v280
    %326 = vmatprep.subr.mxu0 %v283
    %327 = vmatpush1.msra.mxu0 %v282
    %328 = vmatprep.subr.mxu0 %v285
    %329 = vmatpush1.msra.mxu0 %v284
    %330 = vmatprep.subr.mxu0 %v287
    %331 = vmatpush1.msra.mxu0 %v286
    %332 = vmatprep.subr.mxu0 %v289
    %333 = vmatpush1.msra.mxu0 %v288
    %334 = vmatprep.subr.mxu0 %v291
    %335 = vmatpush1.msra.mxu0 %v290
    %336 = vmatprep.subr.mxu0 %v293
    %337 = vmatpush1.msra.mxu0 %v292
    %338 = vmatprep.subr.mxu0 %v295
    %339 = vmatpush1.msra.mxu0 %v294
    %340 = vmatprep.subr.mxu0 %v297
    %341 = vmatpush1.msra.mxu0 %v296
    %342 = vmatprep.subr.mxu0 %v299
    %343 = vmatpush1.msra.mxu0 %v298
    %344 = vmatprep.subr.mxu0 %v301
    %345 = vmatpush1.msra.mxu0 %v300
    %346 = vmatprep.subr.mxu0 %v303
    %347 = vmatpush1.msra.mxu0 %v302
    %348 = vmatprep.subr.mxu0 %v305
    %349 = vmatpush1.msra.mxu0 %v304
    %350 = vmatprep.subr.mxu0 0.0
    %351 = vmatpush1.msra.mxu0 0.0
    %352 = vmatprep.subr.mxu0 0.0
    %353 = vmatpush1.msra.mxu0 0.0
    %354 = vmatprep.subr.mxu0 0.0
    %355 = vmatpush1.msra.mxu0 0.0
    %356 = vmatprep.subr.mxu0 0.0
    %357 = vmatpush1.msra.mxu0 0.0
    %358 = vmatprep.subr.mxu0 0.0
    %359 = vmatpush1.msra.mxu0 0.0
    %360 = vmatprep.subr.mxu0 0.0
    %361 = vmatpush1.msra.mxu0 0.0
    %362 = vmatprep.subr.mxu0 0.0
    %363 = vmatpush1.msra.mxu0 0.0
    %364 = vmatprep.subr.mxu0 0.0
    %365 = vmatpush1.msra.mxu0 0.0
    %366 = vmatprep.subr.mxu0 0.0
    %367 = vmatpush1.msra.mxu0 0.0
    %368 = vmatprep.subr.mxu0 0.0
    %369 = vmatpush1.msra.mxu0 0.0
    %370 = vmatprep.subr.mxu0 0.0
    %371 = vmatpush1.msra.mxu0 0.0
    %372 = vmatprep.subr.mxu0 0.0
    %373 = vmatpush1.msra.mxu0 0.0
    %374 = vmatprep.subr.mxu0 0.0
    %375 = vmatpush1.msra.mxu0 0.0
    %376 = vmatprep.subr.mxu0 0.0
    %377 = vmatpush1.msra.mxu0 0.0
    %378 = vmatprep.subr.mxu0 0.0
    %379 = vmatpush1.msra.mxu0 0.0
    %380 = vmatprep.subr.mxu0 0.0
    %381 = vmatpush1.msra.mxu0 0.0
    %382 = vmatprep.mubr.f32.mxu0 0.0
    %383 = vmatmul.mubr.f32.gmra.mrb[0].mxu0 %v273
    %v384 = vpop.f32.mrb[0].mxu0
    %v385 = vadd.f32 %v311, %v384
    %v386 = vpop.f32.mrb[0].mxu0
    %v387 = vadd.f32 %v315, %v386
    %388 = vdwg.mxu0
    %v389 = vmul.f32 %v387, 0.5
    %v390 = vmul.f32 %v389, 1.442695
    %v391 = vpow.pop %v390
    %v392 = vmul.f32 %v391, %v179
    %v393 = vadd.f32 %v385, %v392
    %v394 = vld [vmem:[#allocation10] sm:$0xff]
    %v395 = vld [vmem:[#allocation10 + $0x8] sm:$0xff]
    %v396 = vld [vmem:[#allocation10 + $0x10] sm:$0xff]
    %v397 = vld [vmem:[#allocation10 + $0x18] sm:$0xff]
    %v398 = vld [vmem:[#allocation10 + $0x20] sm:$0xff]
    %v399 = vld [vmem:[#allocation10 + $0x28] sm:$0xff]
    %v400 = vld [vmem:[#allocation10 + $0x30] sm:$0xff]
    %v401 = vld [vmem:[#allocation10 + $0x38] sm:$0xff]
    %v402 = vld [vmem:[#allocation10 + $0x40] sm:$0xff]
    %v403 = vld [vmem:[#allocation10 + $0x48] sm:$0xff]
    %v404 = vld [vmem:[#allocation10 + $0x50] sm:$0xff]
    %v405 = vld [vmem:[#allocation10 + $0x58] sm:$0xff]
    %v406 = vld [vmem:[#allocation10 + $0x60] sm:$0xff]
    %v407 = vld [vmem:[#allocation10 + $0x68] sm:$0xff]
    %v408 = vld [vmem:[#allocation10 + $0x70] sm:$0xff]
    %v409 = vld [vmem:[#allocation10 + $0x78] sm:$0xff]
    %v410 = vld [vmem:[%s7] sm:$0x1]
    %v412 = vlaneseq
    %v413 = vshrl.u32 %v412, 7
    %v414 = vsub.s32 0, %v413
    %v415 = vrot.slane %v410, %v414
    %417 = vmatprep.subr.mxu0 0.0
    %418 = vmatpush1.msra.mxu0 %v394
    %419 = vmatprep.subr.mxu0 0.0
    %420 = vmatpush1.msra.mxu0 %v395
    %421 = vmatprep.subr.mxu0 0.0
    %422 = vmatpush1.msra.mxu0 %v396
    %423 = vmatprep.subr.mxu0 0.0
    %424 = vmatpush1.msra.mxu0 %v397
    %425 = vmatprep.subr.mxu0 0.0
    %426 = vmatpush1.msra.mxu0 %v398
    %427 = vmatprep.subr.mxu0 0.0
    %428 = vmatpush1.msra.mxu0 %v399
    %429 = vmatprep.subr.mxu0 0.0
    %430 = vmatpush1.msra.mxu0 %v400
    %431 = vmatprep.subr.mxu0 0.0
    %432 = vmatpush1.msra.mxu0 %v401
    %433 = vmatprep.subr.mxu0 0.0
    %434 = vmatpush1.msra.mxu0 %v402
    %435 = vmatprep.subr.mxu0 0.0
    %436 = vmatpush1.msra.mxu0 %v403
    %437 = vmatprep.subr.mxu0 0.0
    %438 = vmatpush1.msra.mxu0 %v404
    %439 = vmatprep.subr.mxu0 0.0
    %440 = vmatpush1.msra.mxu0 %v405
    %441 = vmatprep.subr.mxu0 0.0
    %442 = vmatpush1.msra.mxu0 %v406
    %443 = vmatprep.subr.mxu0 0.0
    %444 = vmatpush1.msra.mxu0 %v407
    %445 = vmatprep.subr.mxu0 0.0
    %446 = vmatpush1.msra.mxu0 %v408
    %447 = vmatprep.subr.mxu0 0.0
    %448 = vmatpush1.msra.mxu0 %v409
    %449 = vmatprep.subr.mxu0 0.0
    %450 = vmatpush1.msra.mxu0 0.0
    %451 = vmatprep.subr.mxu0 0.0
    %452 = vmatpush1.msra.mxu0 0.0
    %453 = vmatprep.subr.mxu0 0.0
    %454 = vmatpush1.msra.mxu0 0.0
    %455 = vmatprep.subr.mxu0 0.0
    %456 = vmatpush1.msra.mxu0 0.0
    %457 = vmatprep.subr.mxu0 0.0
    %458 = vmatpush1.msra.mxu0 0.0
    %459 = vmatprep.subr.mxu0 0.0
    %460 = vmatpush1.msra.mxu0 0.0
    %461 = vmatprep.subr.mxu0 0.0
    %462 = vmatpush1.msra.mxu0 0.0
    %463 = vmatprep.subr.mxu0 0.0
    %464 = vmatpush1.msra.mxu0 0.0
    %465 = vmatprep.subr.mxu0 0.0
    %466 = vmatpush1.msra.mxu0 0.0
    %467 = vmatprep.subr.mxu0 0.0
    %468 = vmatpush1.msra.mxu0 0.0
    %469 = vmatprep.subr.mxu0 0.0
    %470 = vmatpush1.msra.mxu0 0.0
    %471 = vmatprep.subr.mxu0 0.0
    %472 = vmatpush1.msra.mxu0 0.0
    %473 = vmatprep.subr.mxu0 0.0
    %474 = vmatpush1.msra.mxu0 0.0
    %475 = vmatprep.subr.mxu0 0.0
    %476 = vmatpush1.msra.mxu0 0.0
    %477 = vmatprep.subr.mxu0 0.0
    %478 = vmatpush1.msra.mxu0 0.0
    %479 = vmatprep.subr.mxu0 0.0
    %480 = vmatpush1.msra.mxu0 0.0
    %481 = vmatprep.mubr.f32.mxu0 0.0
    %482 = vmatmul.mubr.f32.gmra.mrb[0].mxu0 %v393
    %v483 = vpop.f32.mrb[0].mxu0
    %v484 = vadd.f32 %v415, %v483
    %v485 = vpop.f32.mrb[0].mxu0
    %486 = vdwg.mxu0
    %v487 = vlaneseq
    %v488 = vand.u32 %v487, 127
    %vm489 = vcmp.lt.s32.totalorder %v488, 8
    %v490 = vsel %vm489, %v484, -1e+30
    %491 = vmax.xlane.f32.xlu0 %v490
    %v492 = vpop.xlane.xlu0 %491
    %v493 = vsub.f32 %v490, %v492
    %v494 = vmul.f32 %v493, 1.442695
    %v495 = vpow.pop %v494
    %496 = vadd.xlane.f32.xlu0 %v495
    %v497 = vpop.xlane.xlu0 %496
    %v498 = vrcp.pop %v497
    %v499 = vmul.f32 %v495, %v498
    %v500 = vld [vmem:[#allocation11] sm:$0xff]
    %v501 = vld [vmem:[#allocation11 + $0x8] sm:$0xff]
    %v502 = vld [vmem:[#allocation11 + $0x10] sm:$0xff]
    %v503 = vld [vmem:[#allocation11 + $0x18] sm:$0xff]
    %v504 = vld [vmem:[#allocation11 + $0x20] sm:$0xff]
    %v505 = vld [vmem:[#allocation11 + $0x28] sm:$0xff]
    %v506 = vld [vmem:[#allocation11 + $0x30] sm:$0xff]
    %v507 = vld [vmem:[#allocation11 + $0x38] sm:$0xff]
    %v508 = vld [vmem:[#allocation11 + $0x40] sm:$0xff]
    %v509 = vld [vmem:[#allocation11 + $0x48] sm:$0xff]
    %v510 = vld [vmem:[#allocation11 + $0x50] sm:$0xff]
    %v511 = vld [vmem:[#allocation11 + $0x58] sm:$0xff]
    %v512 = vld [vmem:[#allocation11 + $0x60] sm:$0xff]
    %v513 = vld [vmem:[#allocation11 + $0x68] sm:$0xff]
    %v514 = vld [vmem:[#allocation11 + $0x70] sm:$0xff]
    %v515 = vld [vmem:[#allocation11 + $0x78] sm:$0xff]
    %v516 = vld [vmem:[%s9] sm:$0x1]
    %v518 = vlaneseq
    %v519 = vshrl.u32 %v518, 7
    %v520 = vsub.s32 0, %v519
    %v521 = vrot.slane %v516, %v520
    %523 = vmatprep.subr.mxu0 0.0
    %524 = vmatpush1.msra.mxu0 %v500
    %525 = vmatprep.subr.mxu0 0.0
    %526 = vmatpush1.msra.mxu0 %v501
    %527 = vmatprep.subr.mxu0 0.0
    %528 = vmatpush1.msra.mxu0 %v502
    %529 = vmatprep.subr.mxu0 0.0
    %530 = vmatpush1.msra.mxu0 %v503
    %531 = vmatprep.subr.mxu0 0.0
    %532 = vmatpush1.msra.mxu0 %v504
    %533 = vmatprep.subr.mxu0 0.0
    %534 = vmatpush1.msra.mxu0 %v505
    %535 = vmatprep.subr.mxu0 0.0
    %536 = vmatpush1.msra.mxu0 %v506
    %537 = vmatprep.subr.mxu0 0.0
    %538 = vmatpush1.msra.mxu0 %v507
    %539 = vmatprep.subr.mxu0 0.0
    %540 = vmatpush1.msra.mxu0 %v508
    %541 = vmatprep.subr.mxu0 0.0
    %542 = vmatpush1.msra.mxu0 %v509
    %543 = vmatprep.subr.mxu0 0.0
    %544 = vmatpush1.msra.mxu0 %v510
    %545 = vmatprep.subr.mxu0 0.0
    %546 = vmatpush1.msra.mxu0 %v511
    %547 = vmatprep.subr.mxu0 0.0
    %548 = vmatpush1.msra.mxu0 %v512
    %549 = vmatprep.subr.mxu0 0.0
    %550 = vmatpush1.msra.mxu0 %v513
    %551 = vmatprep.subr.mxu0 0.0
    %552 = vmatpush1.msra.mxu0 %v514
    %553 = vmatprep.subr.mxu0 0.0
    %554 = vmatpush1.msra.mxu0 %v515
    %555 = vmatprep.subr.mxu0 0.0
    %556 = vmatpush1.msra.mxu0 0.0
    %557 = vmatprep.subr.mxu0 0.0
    %558 = vmatpush1.msra.mxu0 0.0
    %559 = vmatprep.subr.mxu0 0.0
    %560 = vmatpush1.msra.mxu0 0.0
    %561 = vmatprep.subr.mxu0 0.0
    %562 = vmatpush1.msra.mxu0 0.0
    %563 = vmatprep.subr.mxu0 0.0
    %564 = vmatpush1.msra.mxu0 0.0
    %565 = vmatprep.subr.mxu0 0.0
    %566 = vmatpush1.msra.mxu0 0.0
    %567 = vmatprep.subr.mxu0 0.0
    %568 = vmatpush1.msra.mxu0 0.0
    %569 = vmatprep.subr.mxu0 0.0
    %570 = vmatpush1.msra.mxu0 0.0
    %571 = vmatprep.subr.mxu0 0.0
    %572 = vmatpush1.msra.mxu0 0.0
    %573 = vmatprep.subr.mxu0 0.0
    %574 = vmatpush1.msra.mxu0 0.0
    %575 = vmatprep.subr.mxu0 0.0
    %576 = vmatpush1.msra.mxu0 0.0
    %577 = vmatprep.subr.mxu0 0.0
    %578 = vmatpush1.msra.mxu0 0.0
    %579 = vmatprep.subr.mxu0 0.0
    %580 = vmatpush1.msra.mxu0 0.0
    %581 = vmatprep.subr.mxu0 0.0
    %582 = vmatpush1.msra.mxu0 0.0
    %583 = vmatprep.subr.mxu0 0.0
    %584 = vmatpush1.msra.mxu0 0.0
    %585 = vmatprep.subr.mxu0 0.0
    %586 = vmatpush1.msra.mxu0 0.0
    %587 = vmatprep.mubr.f32.mxu0 0.0
    %588 = vmatmul.mubr.f32.gmra.mrb[0].mxu0 %v499
    %v589 = vpop.f32.mrb[0].mxu0
    %v590 = vadd.f32 %v521, %v589
    %v591 = vpop.f32.mrb[0].mxu0
    %592 = vdwg.mxu0
    %v593 = vmax.f32 %v590, 0.0
    %v594 = vld [vmem:[#allocation13] sm:$0xff]
    %v595 = vld [vmem:[#allocation13 + $0x8] sm:$0xff]
    %v596 = vld [vmem:[#allocation13 + $0x10] sm:$0xff]
    %v597 = vld [vmem:[#allocation13 + $0x18] sm:$0xff]
    %v598 = vld [vmem:[#allocation13 + $0x20] sm:$0xff]
    %v599 = vld [vmem:[#allocation13 + $0x28] sm:$0xff]
    %v600 = vld [vmem:[#allocation13 + $0x30] sm:$0xff]
    %v601 = vld [vmem:[#allocation13 + $0x38] sm:$0xff]
    %v602 = vld [vmem:[#allocation13 + $0x40] sm:$0xff]
    %v603 = vld [vmem:[#allocation13 + $0x48] sm:$0xff]
    %v604 = vld [vmem:[#allocation13 + $0x50] sm:$0xff]
    %v605 = vld [vmem:[#allocation13 + $0x58] sm:$0xff]
    %v606 = vld [vmem:[#allocation13 + $0x60] sm:$0xff]
    %v607 = vld [vmem:[#allocation13 + $0x68] sm:$0xff]
    %v608 = vld [vmem:[#allocation13 + $0x70] sm:$0xff]
    %v609 = vld [vmem:[#allocation13 + $0x78] sm:$0xff]
    %v610 = vld [vmem:[%s11] sm:$0x1]
    %v612 = vlaneseq
    %v613 = vshrl.u32 %v612, 7
    %v614 = vsub.s32 0, %v613
    %v615 = vrot.slane %v610, %v614
    %617 = vmatprep.subr.mxu0 0.0
    %618 = vmatpush1.msra.mxu0 %v594
    %619 = vmatprep.subr.mxu0 0.0
    %620 = vmatpush1.msra.mxu0 %v595
    %621 = vmatprep.subr.mxu0 0.0
    %622 = vmatpush1.msra.mxu0 %v596
    %623 = vmatprep.subr.mxu0 0.0
    %624 = vmatpush1.msra.mxu0 %v597
    %625 = vmatprep.subr.mxu0 0.0
    %626 = vmatpush1.msra.mxu0 %v598
    %627 = vmatprep.subr.mxu0 0.0
    %628 = vmatpush1.msra.mxu0 %v599
    %629 = vmatprep.subr.mxu0 0.0
    %630 = vmatpush1.msra.mxu0 %v600
    %631 = vmatprep.subr.mxu0 0.0
    %632 = vmatpush1.msra.mxu0 %v601
    %633 = vmatprep.subr.mxu0 0.0
    %634 = vmatpush1.msra.mxu0 %v602
    %635 = vmatprep.subr.mxu0 0.0
    %636 = vmatpush1.msra.mxu0 %v603
    %637 = vmatprep.subr.mxu0 0.0
    %638 = vmatpush1.msra.mxu0 %v604
    %639 = vmatprep.subr.mxu0 0.0
    %640 = vmatpush1.msra.mxu0 %v605
    %641 = vmatprep.subr.mxu0 0.0
    %642 = vmatpush1.msra.mxu0 %v606
    %643 = vmatprep.subr.mxu0 0.0
    %644 = vmatpush1.msra.mxu0 %v607
    %645 = vmatprep.subr.mxu0 0.0
    %646 = vmatpush1.msra.mxu0 %v608
    %647 = vmatprep.subr.mxu0 0.0
    %648 = vmatpush1.msra.mxu0 %v609
    %649 = vmatprep.subr.mxu0 0.0
    %650 = vmatpush1.msra.mxu0 0.0
    %651 = vmatprep.subr.mxu0 0.0
    %652 = vmatpush1.msra.mxu0 0.0
    %653 = vmatprep.subr.mxu0 0.0
    %654 = vmatpush1.msra.mxu0 0.0
    %655 = vmatprep.subr.mxu0 0.0
    %656 = vmatpush1.msra.mxu0 0.0
    %657 = vmatprep.subr.mxu0 0.0
    %658 = vmatpush1.msra.mxu0 0.0
    %659 = vmatprep.subr.mxu0 0.0
    %660 = vmatpush1.msra.mxu0 0.0
    %661 = vmatprep.subr.mxu0 0.0
    %662 = vmatpush1.msra.mxu0 0.0
    %663 = vmatprep.subr.mxu0 0.0
    %664 = vmatpush1.msra.mxu0 0.0
    %665 = vmatprep.subr.mxu0 0.0
    %666 = vmatpush1.msra.mxu0 0.0
    %667 = vmatprep.subr.mxu0 0.0
    %668 = vmatpush1.msra.mxu0 0.0
    %669 = vmatprep.subr.mxu0 0.0
    %670 = vmatpush1.msra.mxu0 0.0
    %671 = vmatprep.subr.mxu0 0.0
    %672 = vmatpush1.msra.mxu0 0.0
    %673 = vmatprep.subr.mxu0 0.0
    %674 = vmatpush1.msra.mxu0 0.0
    %675 = vmatprep.subr.mxu0 0.0
    %676 = vmatpush1.msra.mxu0 0.0
    %677 = vmatprep.subr.mxu0 0.0
    %678 = vmatpush1.msra.mxu0 0.0
    %679 = vmatprep.subr.mxu0 0.0
    %680 = vmatpush1.msra.mxu0 0.0
    %681 = vmatprep.mubr.f32.mxu0 0.0
    %682 = vmatmul.mubr.f32.gmra.mrb[0].mxu0 %v593
    %v683 = vpop.f32.mrb[0].mxu0
    %v684 = vadd.f32 %v615, %v683
    %v685 = vpop.f32.mrb[0].mxu0
    %686 = vdwg.mxu0
    %vm687 = vcmp.lt.s32.totalorder %v488, 32
    %v688 = vsel %vm687, %v684, -1e+30
    %689 = vmax.xlane.f32.xlu0 %v688
    %v690 = vpop.xlane.xlu0 %689
    %v691 = vsub.f32 %v688, %v690
    %v692 = vmul.f32 %v691, 1.442695
    %v693 = vpow.pop %v692
    %694 = vadd.xlane.f32.xlu0 %v693
    %v695 = vpop.xlane.xlu0 %694
    %v696 = vrcp.pop %v695
    %v697 = vmul.f32 %v693, %v696
    %v698 = vld [vmem:[#allocation14] sm:$0xff]
    %v699 = vld [vmem:[#allocation14 + $0x8] sm:$0xff]
    %v700 = vld [vmem:[#allocation14 + $0x10] sm:$0xff]
    %v701 = vld [vmem:[#allocation14 + $0x18] sm:$0xff]
    %v702 = vld [vmem:[#allocation14 + $0x20] sm:$0xff]
    %v703 = vld [vmem:[#allocation14 + $0x28] sm:$0xff]
    %v704 = vld [vmem:[#allocation14 + $0x30] sm:$0xff]
    %v705 = vld [vmem:[#allocation14 + $0x38] sm:$0xff]
    %v706 = vld [vmem:[#allocation14 + $0x40] sm:$0xff]
    %v707 = vld [vmem:[#allocation14 + $0x48] sm:$0xff]
    %v708 = vld [vmem:[#allocation14 + $0x50] sm:$0xff]
    %v709 = vld [vmem:[#allocation14 + $0x58] sm:$0xff]
    %v710 = vld [vmem:[#allocation14 + $0x60] sm:$0xff]
    %v711 = vld [vmem:[#allocation14 + $0x68] sm:$0xff]
    %v712 = vld [vmem:[#allocation14 + $0x70] sm:$0xff]
    %v713 = vld [vmem:[#allocation14 + $0x78] sm:$0xff]
    %v714 = vld [vmem:[%s13] sm:$0x1]
    %v716 = vlaneseq
    %v717 = vshrl.u32 %v716, 7
    %v718 = vsub.s32 0, %v717
    %v719 = vrot.slane %v714, %v718
    %721 = vmatprep.subr.mxu0 0.0
    %722 = vmatpush1.msra.mxu0 %v698
    %723 = vmatprep.subr.mxu0 0.0
    %724 = vmatpush1.msra.mxu0 %v699
    %725 = vmatprep.subr.mxu0 0.0
    %726 = vmatpush1.msra.mxu0 %v700
    %727 = vmatprep.subr.mxu0 0.0
    %728 = vmatpush1.msra.mxu0 %v701
    %729 = vmatprep.subr.mxu0 0.0
    %730 = vmatpush1.msra.mxu0 %v702
    %731 = vmatprep.subr.mxu0 0.0
    %732 = vmatpush1.msra.mxu0 %v703
    %733 = vmatprep.subr.mxu0 0.0
    %734 = vmatpush1.msra.mxu0 %v704
    %735 = vmatprep.subr.mxu0 0.0
    %736 = vmatpush1.msra.mxu0 %v705
    %737 = vmatprep.subr.mxu0 0.0
    %738 = vmatpush1.msra.mxu0 %v706
    %739 = vmatprep.subr.mxu0 0.0
    %740 = vmatpush1.msra.mxu0 %v707
    %741 = vmatprep.subr.mxu0 0.0
    %742 = vmatpush1.msra.mxu0 %v708
    %743 = vmatprep.subr.mxu0 0.0
    %744 = vmatpush1.msra.mxu0 %v709
    %745 = vmatprep.subr.mxu0 0.0
    %746 = vmatpush1.msra.mxu0 %v710
    %747 = vmatprep.subr.mxu0 0.0
    %748 = vmatpush1.msra.mxu0 %v711
    %749 = vmatprep.subr.mxu0 0.0
    %750 = vmatpush1.msra.mxu0 %v712
    %751 = vmatprep.subr.mxu0 0.0
    %752 = vmatpush1.msra.mxu0 %v713
    %753 = vmatprep.subr.mxu0 0.0
    %754 = vmatpush1.msra.mxu0 0.0
    %755 = vmatprep.subr.mxu0 0.0
    %756 = vmatpush1.msra.mxu0 0.0
    %757 = vmatprep.subr.mxu0 0.0
    %758 = vmatpush1.msra.mxu0 0.0
    %759 = vmatprep.subr.mxu0 0.0
    %760 = vmatpush1.msra.mxu0 0.0
    %761 = vmatprep.subr.mxu0 0.0
    %762 = vmatpush1.msra.mxu0 0.0
    %763 = vmatprep.subr.mxu0 0.0
    %764 = vmatpush1.msra.mxu0 0.0
    %765 = vmatprep.subr.mxu0 0.0
    %766 = vmatpush1.msra.mxu0 0.0
    %767 = vmatprep.subr.mxu0 0.0
    %768 = vmatpush1.msra.mxu0 0.0
    %769 = vmatprep.subr.mxu0 0.0
    %770 = vmatpush1.msra.mxu0 0.0
    %771 = vmatprep.subr.mxu0 0.0
    %772 = vmatpush1.msra.mxu0 0.0
    %773 = vmatprep.subr.mxu0 0.0
    %774 = vmatpush1.msra.mxu0 0.0
    %775 = vmatprep.subr.mxu0 0.0
    %776 = vmatpush1.msra.mxu0 0.0
    %777 = vmatprep.subr.mxu0 0.0
    %778 = vmatpush1.msra.mxu0 0.0
    %779 = vmatprep.subr.mxu0 0.0
    %780 = vmatpush1.msra.mxu0 0.0
    %781 = vmatprep.subr.mxu0 0.0
    %782 = vmatpush1.msra.mxu0 0.0
    %783 = vmatprep.subr.mxu0 0.0
    %784 = vmatpush1.msra.mxu0 0.0
    %785 = vmatprep.mubr.f32.mxu0 0.0
    %786 = vmatmul.mubr.f32.gmra.mrb[0].mxu0 %v697
    %v787 = vpop.f32.mrb[0].mxu0
    %v788 = vadd.f32 %v719, %v787
    %v789 = vpop.f32.mrb[0].mxu0
    %790 = vdwg.mxu0
    %v791 = vmax.f32 %v788, 0.0
    %v792 = vld [vmem:[#allocation16] sm:$0xff]
    %v793 = vld [vmem:[#allocation16 + $0x8] sm:$0xff]
    %v794 = vld [vmem:[#allocation16 + $0x10] sm:$0xff]
    %v795 = vld [vmem:[#allocation16 + $0x18] sm:$0xff]
    %v796 = vld [vmem:[#allocation16 + $0x20] sm:$0xff]
    %v797 = vld [vmem:[#allocation16 + $0x28] sm:$0xff]
    %v798 = vld [vmem:[#allocation16 + $0x30] sm:$0xff]
    %v799 = vld [vmem:[#allocation16 + $0x38] sm:$0xff]
    %v800 = vld [vmem:[#allocation16 + $0x40] sm:$0xff]
    %v801 = vld [vmem:[#allocation16 + $0x48] sm:$0xff]
    %v802 = vld [vmem:[#allocation16 + $0x50] sm:$0xff]
    %v803 = vld [vmem:[#allocation16 + $0x58] sm:$0xff]
    %v804 = vld [vmem:[#allocation16 + $0x60] sm:$0xff]
    %v805 = vld [vmem:[#allocation16 + $0x68] sm:$0xff]
    %v806 = vld [vmem:[#allocation16 + $0x70] sm:$0xff]
    %v807 = vld [vmem:[#allocation16 + $0x78] sm:$0xff]
    %v808 = vld [vmem:[%s15] sm:$0x1]
    %v810 = vlaneseq
    %v811 = vshrl.u32 %v810, 7
    %v812 = vsub.s32 0, %v811
    %v813 = vrot.slane %v808, %v812
    %815 = vmatprep.subr.mxu0 0.0
    %816 = vmatpush1.msra.mxu0 %v792
    %817 = vmatprep.subr.mxu0 0.0
    %818 = vmatpush1.msra.mxu0 %v793
    %819 = vmatprep.subr.mxu0 0.0
    %820 = vmatpush1.msra.mxu0 %v794
    %821 = vmatprep.subr.mxu0 0.0
    %822 = vmatpush1.msra.mxu0 %v795
    %823 = vmatprep.subr.mxu0 0.0
    %824 = vmatpush1.msra.mxu0 %v796
    %825 = vmatprep.subr.mxu0 0.0
    %826 = vmatpush1.msra.mxu0 %v797
    %827 = vmatprep.subr.mxu0 0.0
    %828 = vmatpush1.msra.mxu0 %v798
    %829 = vmatprep.subr.mxu0 0.0
    %830 = vmatpush1.msra.mxu0 %v799
    %831 = vmatprep.subr.mxu0 0.0
    %832 = vmatpush1.msra.mxu0 %v800
    %833 = vmatprep.subr.mxu0 0.0
    %834 = vmatpush1.msra.mxu0 %v801
    %835 = vmatprep.subr.mxu0 0.0
    %836 = vmatpush1.msra.mxu0 %v802
    %837 = vmatprep.subr.mxu0 0.0
    %838 = vmatpush1.msra.mxu0 %v803
    %839 = vmatprep.subr.mxu0 0.0
    %840 = vmatpush1.msra.mxu0 %v804
    %841 = vmatprep.subr.mxu0 0.0
    %842 = vmatpush1.msra.mxu0 %v805
    %843 = vmatprep.subr.mxu0 0.0
    %844 = vmatpush1.msra.mxu0 %v806
    %845 = vmatprep.subr.mxu0 0.0
    %846 = vmatpush1.msra.mxu0 %v807
    %847 = vmatprep.subr.mxu0 0.0
    %848 = vmatpush1.msra.mxu0 0.0
    %849 = vmatprep.subr.mxu0 0.0
    %850 = vmatpush1.msra.mxu0 0.0
    %851 = vmatprep.subr.mxu0 0.0
    %852 = vmatpush1.msra.mxu0 0.0
    %853 = vmatprep.subr.mxu0 0.0
    %854 = vmatpush1.msra.mxu0 0.0
    %855 = vmatprep.subr.mxu0 0.0
    %856 = vmatpush1.msra.mxu0 0.0
    %857 = vmatprep.subr.mxu0 0.0
    %858 = vmatpush1.msra.mxu0 0.0
    %859 = vmatprep.subr.mxu0 0.0
    %860 = vmatpush1.msra.mxu0 0.0
    %861 = vmatprep.subr.mxu0 0.0
    %862 = vmatpush1.msra.mxu0 0.0
    %863 = vmatprep.subr.mxu0 0.0
    %864 = vmatpush1.msra.mxu0 0.0
    %865 = vmatprep.subr.mxu0 0.0
    %866 = vmatpush1.msra.mxu0 0.0
    %867 = vmatprep.subr.mxu0 0.0
    %868 = vmatpush1.msra.mxu0 0.0
    %869 = vmatprep.subr.mxu0 0.0
    %870 = vmatpush1.msra.mxu0 0.0
    %871 = vmatprep.subr.mxu0 0.0
    %872 = vmatpush1.msra.mxu0 0.0
    %873 = vmatprep.subr.mxu0 0.0
    %874 = vmatpush1.msra.mxu0 0.0
    %875 = vmatprep.subr.mxu0 0.0
    %876 = vmatpush1.msra.mxu0 0.0
    %877 = vmatprep.subr.mxu0 0.0
    %878 = vmatpush1.msra.mxu0 0.0
    %879 = vmatprep.mubr.f32.mxu0 0.0
    %880 = vmatmul.mubr.f32.gmra.mrb[0].mxu0 %v791
    %v881 = vpop.f32.mrb[0].mxu0
    %v882 = vadd.f32 %v813, %v881
    %v883 = vpop.f32.mrb[0].mxu0
    %884 = vdwg.mxu0
    %v885 = vmax.f32 %v882, 0.0
    %886 = vst [vmem:[#allocation17] sm:$0xff] %v684
    %887 = vst [vmem:[#allocation18] sm:$0xff] %v885
    %888 = vst [vmem:[#allocation20] sm:$0xff] %v385
    %889 = vst [vmem:[#allocation21] sm:$0xff] %v387
    // Predicated region
    $region102: #{tpu_custom_call.1} parent=1 // pred_check
      _
    $region103: #{tpu_custom_call.1} parent=1 // pred_check_branch
      %891 = sbr.rel (0) target = $region105
    $region104: #{tpu_custom_call.1} parent=1 // pred_region
      %s893 = ssub.s32 128, 128
      %894 = vsyncadd [#allocation4], %s893
      %s896 = sshll.u32 [#allocation17], 4
      %s897 = int_to_ptr.vmem [resolvable:$true] %s896
      %899 = dma.vmem_to_hbm [thread:$0]  %s897, 128, %s16, [#allocation4]
    $region105: #{tpu_custom_call.1} parent=1 // pred_fallthru
      _
    // Predicated region
    $region106: #{tpu_custom_call.1} parent=1 // pred_check
      _
    $region107: #{tpu_custom_call.1} parent=1 // pred_check_branch
      %901 = sbr.rel (0) target = $region109
    $region108: #{tpu_custom_call.1} parent=1 // pred_region
      %s903 = ssub.s32 128, 128
      %904 = vsyncadd [#allocation19], %s903
      %s906 = sshll.u32 [#allocation18], 4
      %s907 = int_to_ptr.vmem [resolvable:$true] %s906
      %909 = dma.vmem_to_hbm [thread:$0]  %s907, 128, %s17, [#allocation19]
    $region109: #{tpu_custom_call.1} parent=1 // pred_fallthru
      _
    // Predicated region
    $region110: #{tpu_custom_call.1} parent=1 // pred_check
      _
    $region111: #{tpu_custom_call.1} parent=1 // pred_check_branch
      %911 = sbr.rel (0) target = $region113
    $region112: #{tpu_custom_call.1} parent=1 // pred_region
      %s913 = ssub.s32 128, 128
      %914 = vsyncadd [#allocation19], %s913
      %s916 = sshll.u32 [#allocation20], 4
      %s917 = int_to_ptr.vmem [resolvable:$true] %s916
      %919 = dma.vmem_to_hbm [thread:$0]  %s917, 128, %s18, [#allocation19]
    $region113: #{tpu_custom_call.1} parent=1 // pred_fallthru
      _
    // Predicated region
    $region114: #{tpu_custom_call.1} parent=1 // pred_check
      _
    $region115: #{tpu_custom_call.1} parent=1 // pred_check_branch
      %921 = sbr.rel (0) target = $region117
    $region116: #{tpu_custom_call.1} parent=1 // pred_region
      %s923 = ssub.s32 128, 128
      %924 = vsyncadd [#allocation22], %s923
      %s926 = sshll.u32 [#allocation21], 4
      %s927 = int_to_ptr.vmem [resolvable:$true] %s926
      %929 = dma.vmem_to_hbm [thread:$0]  %s927, 128, %s19, [#allocation22]
    $region117: #{tpu_custom_call.1} parent=1 // pred_fallthru
      _
    // Predicated region
    $region118: #{tpu_custom_call.1} parent=1 // pred_check
      _
    $region119: #{tpu_custom_call.1} parent=1 // pred_check_branch
      %931 = sbr.rel (0) target = $region121
    $region120: #{tpu_custom_call.1} parent=1 // pred_region
      %932 = dma.done [#allocation4], 128
    $region121: #{tpu_custom_call.1} parent=1 // pred_fallthru
      _
    // Predicated region
    $region122: #{tpu_custom_call.1} parent=1 // pred_check
      _
    $region123: #{tpu_custom_call.1} parent=1 // pred_check_branch
      %934 = sbr.rel (0) target = $region125
    $region124: #{tpu_custom_call.1} parent=1 // pred_region
      %935 = dma.done [#allocation19], 128
    $region125: #{tpu_custom_call.1} parent=1 // pred_fallthru
      _
    // Predicated region
    $region126: #{tpu_custom_call.1} parent=1 // pred_check
      _
    $region127: #{tpu_custom_call.1} parent=1 // pred_check_branch
      %937 = sbr.rel (0) target = $region129
    $region128: #{tpu_custom_call.1} parent=1 // pred_region
      %938 = dma.done [#allocation19], 128
    $region129: #{tpu_custom_call.1} parent=1 // pred_fallthru
      _
    // Predicated region
    $region130: #{tpu_custom_call.1} parent=1 // pred_check
      _
    $region131: #{tpu_custom_call.1} parent=1 // pred_check_branch
      %940 = sbr.rel (0) target = $region133
    $region132: #{tpu_custom_call.1} parent=1 // pred_region
      %941 = dma.done [#allocation22], 128
    $region133: #{tpu_custom_call.1} parent=1 // pred_fallthru
      _
    %942 = vsyncpa [#allocation3], 1
    %943 = vsyncpa [#allocation6], 1
    %944 = vsyncpa [#allocation9], 1
    %945 = vsyncpa [#allocation12], 1
    %946 = vsyncpa [#allocation15], 1
    %947 = vsyncpa [#allocation4], 1
    %948 = vsyncpa [#allocation19], 1
    %949 = vsyncpa [#allocation22], 1

</llo_original>
